<compile_context>
chip_gen: v6e
topology: v6e:2x2x1
jax: 0.10.0
libtpu: 0.0.40
codegen_flags: <defaults>
</compile_context>

<pallas_src>
import jax
import jax.numpy as jnp
import numpy as np
from jax import lax
from jax.experimental import pallas as pl
from jax.experimental.pallas import tpu as pltpu

# Small synthetic config consistent with VisEst's forward
OUTPUT_DIM = 16            # conv input channels  (PyTorch default 256)
MID_DIM = 2 * OUTPUT_DIM   # hidden conv channels (output_dim * 2)
POOL_SIZE = 7              # must be 7: three valid 3x3 convs take 7 -> 5 -> 3 -> 1
REP_DIM = 64               # representation_dim   (PyTorch default 1024)
BN_EPS = 1e-5

VIS_COL = REP_DIM // 2                                   # lane holding the vis logit
HEAD_WIDTH = ((REP_DIM // 2 + 1 + 127) // 128) * 128     # lane-dense combined head width


def _round_up(x, m):
    return ((x + m - 1) // m) * m


def _pick_max_nb():
    """Batch-tile cap: 128 saturates v5e's 128-row MXUs; 256 for v6e/v7x 256-row MXUs."""
    try:
        kind = jax.devices()[0].device_kind.lower()
    except Exception:
        return 128
    return 128 if "v5" in kind else 256


MAX_NB = _pick_max_nb()


def _vmem_bytes(shape, itemsize):
    """Padded VMEM footprint of one buffer: last two dims tiled to (8*(4/itemsize), 128)."""
    sublane = 8 * (4 // itemsize)
    lead = 1
    for d in shape[:-2]:
        lead *= d
    return lead * _round_up(shape[-2], sublane) * _round_up(shape[-1], 128) * itemsize


def _conv_layer(x, w_ref, shift, n, h_out, w_out):
    """3x3 valid conv (+ folded-BN shift + ReLU) as one im2col matmul on the pseudo grid.

    x      : 2-D bf16 activation (Ref or value); rows ordered (y, x, b) on a 7-wide
             pseudo grid with n samples per (y, x) cell. n % 16 == 0 keeps every tap
             offset (dy*7 + dx)*n on a packed-bf16 sublane boundary (plain vector loads).
    w_ref  : (9*Cin, Cout) bf16 ref, K ordered (dy, dx, cin); BN scale pre-folded.
    shift  : (1, Cout) f32 folded BatchNorm shift (includes conv bias).
    h_out, w_out : valid output height / width (7 -> 5 -> 3 -> 1).
    Returns (((h_out-1)*7 + w_out)*n, Cout) bf16 on the same pseudo grid.
    """
    rows_out = ((h_out - 1) * POOL_SIZE + w_out) * n
    taps = [x[(dy * POOL_SIZE + dx) * n:(dy * POOL_SIZE + dx) * n + rows_out, :]
            for dy in range(3) for dx in range(3)]
    patch = jnp.concatenate(taps, axis=1)                       # single 9-way lane concat
    acc = jnp.dot(patch, w_ref[...],
                  preferred_element_type=jnp.float32)           # one MXU pass per layer
    # TODO(synk): if bundle dumps show spill stores at NB=256, split this dot over
    # pseudo-rows with lax.fori_loop(unroll=True) (perf-review item 10).
    return jnp.maximum(acc + shift, 0.0).astype(jnp.bfloat16)   # f32 epilogue -> bf16


def _make_kernel(nb):
    def kernel(x_ref,
               w1_ref, t1_ref, w2_ref, t2_ref, w3_ref, t3_ref,
               wf_ref, tf_ref, wh_ref, bh_ref,
               out_ref):
        # x_ref: (7*7*nb, C) bf16 pseudo-grid block for the current batch tile.
        a = _conv_layer(x_ref, w1_ref, t1_ref[...], nb, 5, 5)       # 7x7 -> 5x5
        a = _conv_layer(a, w2_ref, t2_ref[...], nb, 3, 3)           # 5x5 -> 3x3
        spatial = _conv_layer(a, w3_ref, t3_ref[...], nb, 1, 1)     # 3x3 -> 1x1: (nb, REP)

        # fc_fuse + folded BatchNorm1d + ReLU (f32 epilogue, bf16 for the next dot)
        fused = jnp.dot(spatial, wf_ref[...], preferred_element_type=jnp.float32)
        fused = jnp.maximum(fused + tf_ref[...], 0.0).astype(jnp.bfloat16)

        # fused lane-dense head: lanes [0, REP/2) = fc_representation, lane VIS_COL = fc_vis
        head = jnp.dot(fused, wh_ref[...], preferred_element_type=jnp.float32) + bh_ref[...]
        sig = pl.reciprocal(1.0 + jnp.exp(-head), approx=True)      # EUP exp + EUP recip
        lane = lax.broadcasted_iota(jnp.int32, head.shape, 1)
        out_ref[...] = jnp.where(lane == VIS_COL, sig, head)        # one unmasked (nb,128) vst

    return kernel


@jax.jit
def visest_forward(roi_pool_output, representation_feature, params):
    # conv_only=True: representation_feature is unused (matches the PyTorch branch)
    del representation_feature
    n, c, h, w = roi_pool_output.shape
    assert h == POOL_SIZE and w == POOL_SIZE, "VisEst requires 7x7 ROI pooling"

    nb = min(MAX_NB, _round_up(n, 16))        # bf16 packs 16 sublanes/vreg -> nb % 16 == 0
    num_blocks = -(-n // nb)
    n_pad = num_blocks * nb

    # bf16 activations from the start: halves the relayout and HBM->VMEM DMA bytes.
    # (N,C,H,W) -> pad batch -> (num_blocks, H*W*nb, C) pseudo-grid, rows (y, x, b)-ordered.
    x = roi_pool_output.astype(jnp.bfloat16)
    x = jnp.pad(x, ((0, n_pad - n), (0, 0), (0, 0), (0, 0)))
    x = jnp.transpose(x, (2, 3, 0, 1))                     # (H, W, N_pad, C)
    x = x.reshape(h, w, num_blocks, nb, c)
    x = jnp.transpose(x, (2, 0, 1, 3, 4))                  # (blocks, H, W, nb, C)
    x = x.reshape(num_blocks, h * w * nb, c)

    args = (x,
            params['w1'], params['t1'],
            params['w2'], params['t2'],
            params['w3'], params['t3'],
            params['wf'], params['tf'],
            params['wh'], params['bh'])

    def full_spec(a):
        return pl.BlockSpec(a.shape, lambda b, nd=a.ndim: (0,) * nd)   # resident weights

    in_specs = [pl.BlockSpec((None, h * w * nb, c), lambda b: (b, 0, 0))]
    in_specs += [full_spec(a) for a in args[1:]]

    # vmem_limit_bytes from actual buffer sizes (double-buffered pipeline blocks, resident
    # weights, dominant in-kernel intermediates), not a flat 32 MiB (review item 5).
    in_bytes = _vmem_bytes((h * w * nb, c), 2)
    out_bytes = _vmem_bytes((nb, HEAD_WIDTH), 4)
    w_bytes = sum(_vmem_bytes(a.shape, a.dtype.itemsize) for a in args[1:])
    rows1 = ((POOL_SIZE - 3) * POOL_SIZE + POOL_SIZE - 2) * nb       # layer-1 patch rows
    patch1 = _vmem_bytes((rows1, 9 * c), 2)
    acc1 = _vmem_bytes((rows1, MID_DIM), 4)
    vmem_limit = int(min(max(2 * (in_bytes + out_bytes + w_bytes)
                             + 4 * (patch1 + acc1) + (8 << 20), 16 << 20), 64 << 20))

    out = pl.pallas_call(
        _make_kernel(nb),
        out_shape=jax.ShapeDtypeStruct((n_pad, HEAD_WIDTH), jnp.float32),
        grid=(num_blocks,),
        in_specs=in_specs,
        out_specs=pl.BlockSpec((nb, HEAD_WIDTH), lambda b: (b, 0)),
        compiler_params=pltpu.CompilerParams(
            dimension_semantics=("parallel",),             # megacore / v7x dual-TC sharding
            vmem_limit_bytes=vmem_limit),
    )(*args)

    # Zero-padded batch rows carry garbage through the BN-shift+ReLU path; slice them off.
    vis = out[:n, VIS_COL:VIS_COL + 1]
    rep = out[:n, :REP_DIM // 2]
    return vis, rep


def fold_bn(gamma, beta, mean, var, bias):
    scale = gamma / jnp.sqrt(var + BN_EPS)
    shift = (bias - mean) * scale + beta
    return scale, shift


def make_params(key):
    keys = iter(jax.random.split(key, 40))

    def nrm(shape, scale):
        return scale * jax.random.normal(next(keys), shape, jnp.float32)

    def bn_params(c):
        gamma = 1.0 + nrm((c,), 0.1)
        beta = nrm((c,), 0.1)
        mean = nrm((c,), 0.1)
        var = 0.5 + jax.random.uniform(next(keys), (c,), jnp.float32)
        return gamma, beta, mean, var

    def conv(c_in, c_out):
        w = nrm((c_out, c_in, 3, 3), 0.1)                 # PyTorch OIHW
        b = nrm((c_out,), 0.1)
        scale, shift = fold_bn(*bn_params(c_out), b)
        w2d = jnp.transpose(w, (2, 3, 1, 0)).reshape(9 * c_in, c_out)   # K = (dy, dx, cin)
        w2d = (w2d * scale[None, :]).astype(jnp.bfloat16)               # fold BN scale
        return w2d, shift.reshape(1, c_out)

    def linear(d_in, d_out):
        w = nrm((d_out, d_in), 0.1)                       # PyTorch (out, in)
        b = nrm((d_out,), 0.1)
        return jnp.transpose(w), b

    p = {}
    p['w1'], p['t1'] = conv(OUTPUT_DIM, MID_DIM)
    p['w2'], p['t2'] = conv(MID_DIM, MID_DIM)
    p['w3'], p['t3'] = conv(MID_DIM, REP_DIM)

    wf, bf = linear(REP_DIM, REP_DIM)                     # fc_fuse (conv_only=True)
    scale, shift = fold_bn(*bn_params(REP_DIM), bf)       # bn_fc (eval mode), folded
    p['wf'] = (wf * scale[None, :]).astype(jnp.bfloat16)
    p['tf'] = shift.reshape(1, REP_DIM)

    wv, bv = linear(REP_DIM, 1)                           # fc_vis
    wr, br = linear(REP_DIM, REP_DIM // 2)                # fc_representation
    wh = jnp.zeros((REP_DIM, HEAD_WIDTH), jnp.float32)
    wh = wh.at[:, :REP_DIM // 2].set(wr).at[:, VIS_COL].set(wv[:, 0])
    bh = jnp.zeros((1, HEAD_WIDTH), jnp.float32)
    bh = bh.at[0, :REP_DIM // 2].set(br).at[0, VIS_COL].set(bv[0])
    p['wh'] = wh.astype(jnp.bfloat16)
    p['bh'] = bh
    return p


def reference_forward(roi, params):
    """Pure-JAX f32 reference mirroring the module math with the same folded weights."""
    x = roi.astype(jnp.float32)

    def conv_bn_relu(x, w2d, shift):
        c_in = w2d.shape[0] // 9
        w = w2d.astype(jnp.float32).reshape(3, 3, c_in, w2d.shape[1])   # HWIO
        y = lax.conv_general_dilated(
            x, w, window_strides=(1, 1), padding='VALID',
            dimension_numbers=('NCHW', 'HWIO', 'NCHW'))
        return jnp.maximum(y + shift.reshape(1, -1, 1, 1), 0.0)

    x = conv_bn_relu(x, params['w1'], params['t1'])
    x = conv_bn_relu(x, params['w2'], params['t2'])
    x = conv_bn_relu(x, params['w3'], params['t3'])
    spatial = x[:, :, 0, 0]
    fused = jnp.maximum(spatial @ params['wf'].astype(jnp.float32) + params['tf'], 0.0)
    head = fused @ params['wh'].astype(jnp.float32) + params['bh']
    vis = jax.nn.sigmoid(head[:, VIS_COL:VIS_COL + 1])
    rep = head[:, :REP_DIM // 2]
    return vis, rep


if __name__ == "__main__":
    key = jax.random.PRNGKey(0)
    k_roi, k_rep, k_par = jax.random.split(key, 3)
    params = make_params(k_par)

    # Small single-block run, plus a larger batch that exercises the multi-block grid
    # and the full-width (128/256-row) batch tile.
    for batch in (12, 300):
        roi = jax.random.normal(
            k_roi, (batch, OUTPUT_DIM, POOL_SIZE, POOL_SIZE), jnp.float32)
        rep_feat = jax.random.normal(k_rep, (batch, REP_DIM), jnp.float32)  # unused

        vis, vis_rep = visest_forward(roi, rep_feat, params)
        jax.block_until_ready((vis, vis_rep))

        assert vis.shape == (batch, 1)
        assert vis_rep.shape == (batch, REP_DIM // 2)

        ref_vis, ref_rep = reference_forward(roi, params)
        np.testing.assert_allclose(np.asarray(vis), np.asarray(ref_vis),
                                   rtol=3e-2, atol=3e-2)
        np.testing.assert_allclose(np.asarray(vis_rep), np.asarray(ref_rep),
                                   rtol=3e-2, atol=3e-2)

    print("KERNEL_OK")
</pallas_src>

<mosaic_0001>
module attributes {stable_mosaic.version = 11 : i64} {
  func.func @kernel(%arg0: i32, %arg1: memref<1x784x16xbf16, #tpu.memory_space<vmem>>, %arg2: memref<144x32xbf16, #tpu.memory_space<vmem>>, %arg3: memref<1x32xf32, #tpu.memory_space<vmem>>, %arg4: memref<288x32xbf16, #tpu.memory_space<vmem>>, %arg5: memref<1x32xf32, #tpu.memory_space<vmem>>, %arg6: memref<288x64xbf16, #tpu.memory_space<vmem>>, %arg7: memref<1x64xf32, #tpu.memory_space<vmem>>, %arg8: memref<64x64xbf16, #tpu.memory_space<vmem>>, %arg9: memref<1x64xf32, #tpu.memory_space<vmem>>, %arg10: memref<64x128xbf16, #tpu.memory_space<vmem>>, %arg11: memref<1x128xf32, #tpu.memory_space<vmem>>, %arg12: memref<16x128xf32, #tpu.memory_space<vmem>>) attributes {dimension_semantics = [#tpu.dimension_semantics<parallel>], iteration_bounds = array<i64: 1>, scalar_prefetch = 0 : i64, scratch_operands = 0 : i64, tpu.core_type = #tpu.core_type<tc>, window_params = [{transform_indices = @transform_0, window_bounds = array<i64: 1, 784, 16>}, {pipeline_mode = #tpu.pipeline_mode<synchronous>, transform_indices = @transform_1, window_bounds = array<i64: 144, 32>}, {pipeline_mode = #tpu.pipeline_mode<synchronous>, transform_indices = @transform_2, window_bounds = array<i64: 1, 32>}, {pipeline_mode = #tpu.pipeline_mode<synchronous>, transform_indices = @transform_3, window_bounds = array<i64: 288, 32>}, {pipeline_mode = #tpu.pipeline_mode<synchronous>, transform_indices = @transform_4, window_bounds = array<i64: 1, 32>}, {pipeline_mode = #tpu.pipeline_mode<synchronous>, transform_indices = @transform_5, window_bounds = array<i64: 288, 64>}, {pipeline_mode = #tpu.pipeline_mode<synchronous>, transform_indices = @transform_6, window_bounds = array<i64: 1, 64>}, {pipeline_mode = #tpu.pipeline_mode<synchronous>, transform_indices = @transform_7, window_bounds = array<i64: 64, 64>}, {pipeline_mode = #tpu.pipeline_mode<synchronous>, transform_indices = @transform_8, window_bounds = array<i64: 1, 64>}, {pipeline_mode = #tpu.pipeline_mode<synchronous>, transform_indices = @transform_9, window_bounds = array<i64: 64, 128>}, {pipeline_mode = #tpu.pipeline_mode<synchronous>, transform_indices = @transform_10, window_bounds = array<i64: 1, 128>}, {transform_indices = @transform_11, window_bounds = array<i64: 16, 128>}]} {
    %c0 = arith.constant 0 : index
    %c0_0 = arith.constant 0 : index
    %0 = vector.load %arg3[%c0, %c0_0] : memref<1x32xf32, #tpu.memory_space<vmem>>, vector<1x32xf32>
    %c0_1 = arith.constant 0 : index
    %c0_2 = arith.constant 0 : index
    %c0_3 = arith.constant 0 : index
    %1 = vector.load %arg1[%c0_1, %c0_2, %c0_3] : memref<1x784x16xbf16, #tpu.memory_space<vmem>>, vector<1x528x16xbf16>
    %2 = vector.shape_cast %1 : vector<1x528x16xbf16> to vector<528x16xbf16>
    %c0_4 = arith.constant 0 : index
    %c16 = arith.constant 16 : index
    %c0_5 = arith.constant 0 : index
    %3 = vector.load %arg1[%c0_4, %c16, %c0_5] : memref<1x784x16xbf16, #tpu.memory_space<vmem>>, vector<1x528x16xbf16>
    %4 = vector.shape_cast %3 : vector<1x528x16xbf16> to vector<528x16xbf16>
    %c0_6 = arith.constant 0 : index
    %c32 = arith.constant 32 : index
    %c0_7 = arith.constant 0 : index
    %5 = vector.load %arg1[%c0_6, %c32, %c0_7] : memref<1x784x16xbf16, #tpu.memory_space<vmem>>, vector<1x528x16xbf16>
    %6 = vector.shape_cast %5 : vector<1x528x16xbf16> to vector<528x16xbf16>
    %c0_8 = arith.constant 0 : index
    %c112 = arith.constant 112 : index
    %c0_9 = arith.constant 0 : index
    %7 = vector.load %arg1[%c0_8, %c112, %c0_9] : memref<1x784x16xbf16, #tpu.memory_space<vmem>>, vector<1x528x16xbf16>
    %8 = vector.shape_cast %7 : vector<1x528x16xbf16> to vector<528x16xbf16>
    %c0_10 = arith.constant 0 : index
    %c128 = arith.constant 128 : index
    %c0_11 = arith.constant 0 : index
    %9 = vector.load %arg1[%c0_10, %c128, %c0_11] : memref<1x784x16xbf16, #tpu.memory_space<vmem>>, vector<1x528x16xbf16>
    %10 = vector.shape_cast %9 : vector<1x528x16xbf16> to vector<528x16xbf16>
    %c0_12 = arith.constant 0 : index
    %c144 = arith.constant 144 : index
    %c0_13 = arith.constant 0 : index
    %11 = vector.load %arg1[%c0_12, %c144, %c0_13] : memref<1x784x16xbf16, #tpu.memory_space<vmem>>, vector<1x528x16xbf16>
    %12 = vector.shape_cast %11 : vector<1x528x16xbf16> to vector<528x16xbf16>
    %c0_14 = arith.constant 0 : index
    %c224 = arith.constant 224 : index
    %c0_15 = arith.constant 0 : index
    %13 = vector.load %arg1[%c0_14, %c224, %c0_15] : memref<1x784x16xbf16, #tpu.memory_space<vmem>>, vector<1x528x16xbf16>
    %14 = vector.shape_cast %13 : vector<1x528x16xbf16> to vector<528x16xbf16>
    %c0_16 = arith.constant 0 : index
    %c240 = arith.constant 240 : index
    %c0_17 = arith.constant 0 : index
    %15 = vector.load %arg1[%c0_16, %c240, %c0_17] : memref<1x784x16xbf16, #tpu.memory_space<vmem>>, vector<1x528x16xbf16>
    %16 = vector.shape_cast %15 : vector<1x528x16xbf16> to vector<528x16xbf16>
    %c0_18 = arith.constant 0 : index
    %c256 = arith.constant 256 : index
    %c0_19 = arith.constant 0 : index
    %17 = vector.load %arg1[%c0_18, %c256, %c0_19] : memref<1x784x16xbf16, #tpu.memory_space<vmem>>, vector<1x528x16xbf16>
    %18 = vector.shape_cast %17 : vector<1x528x16xbf16> to vector<528x16xbf16>
    %19 = tpu.concatenate %2, %4, %6, %8, %10, %12, %14, %16, %18 in 1 : vector<528x16xbf16>, vector<528x16xbf16>, vector<528x16xbf16>, vector<528x16xbf16>, vector<528x16xbf16>, vector<528x16xbf16>, vector<528x16xbf16>, vector<528x16xbf16>, vector<528x16xbf16> -> vector<528x144xbf16>
    %c0_20 = arith.constant 0 : index
    %c0_21 = arith.constant 0 : index
    %20 = vector.load %arg2[%c0_20, %c0_21] : memref<144x32xbf16, #tpu.memory_space<vmem>>, vector<144x32xbf16>
    %cst = arith.constant dense<0.000000e+00> : vector<528x32xf32>
    %21 = tpu.matmul %19, %20, %cst {dimension_numbers = #tpu.dot_dimension_numbers<[1], [0], [0], [1], [0, 0, 1, 1], [], []>} : vector<528x144xbf16>, vector<144x32xbf16>, vector<528x32xf32> -> vector<528x32xf32>
    %22 = vector.broadcast %0 : vector<1x32xf32> to vector<528x32xf32>
    %23 = arith.addf %21, %22 : vector<528x32xf32>
    %cst_22 = arith.constant 0.000000e+00 : f32
    %24 = vector.broadcast %cst_22 : f32 to vector<528x32xf32>
    %25 = arith.maximumf %23, %24 : vector<528x32xf32>
    %26 = arith.truncf %25 : vector<528x32xf32> to vector<528x32xbf16>
    %c0_23 = arith.constant 0 : index
    %c0_24 = arith.constant 0 : index
    %27 = vector.load %arg5[%c0_23, %c0_24] : memref<1x32xf32, #tpu.memory_space<vmem>>, vector<1x32xf32>
    %28 = vector.extract_strided_slice %26 {offsets = [0, 0], sizes = [272, 32], strides = [1, 1]} : vector<528x32xbf16> to vector<272x32xbf16>
    %29 = vector.extract_strided_slice %26 {offsets = [16, 0], sizes = [272, 32], strides = [1, 1]} : vector<528x32xbf16> to vector<272x32xbf16>
    %30 = vector.extract_strided_slice %26 {offsets = [32, 0], sizes = [272, 32], strides = [1, 1]} : vector<528x32xbf16> to vector<272x32xbf16>
    %31 = vector.extract_strided_slice %26 {offsets = [112, 0], sizes = [272, 32], strides = [1, 1]} : vector<528x32xbf16> to vector<272x32xbf16>
    %32 = vector.extract_strided_slice %26 {offsets = [128, 0], sizes = [272, 32], strides = [1, 1]} : vector<528x32xbf16> to vector<272x32xbf16>
    %33 = vector.extract_strided_slice %26 {offsets = [144, 0], sizes = [272, 32], strides = [1, 1]} : vector<528x32xbf16> to vector<272x32xbf16>
    %34 = vector.extract_strided_slice %26 {offsets = [224, 0], sizes = [272, 32], strides = [1, 1]} : vector<528x32xbf16> to vector<272x32xbf16>
    %35 = vector.extract_strided_slice %26 {offsets = [240, 0], sizes = [272, 32], strides = [1, 1]} : vector<528x32xbf16> to vector<272x32xbf16>
    %36 = vector.extract_strided_slice %26 {offsets = [256, 0], sizes = [272, 32], strides = [1, 1]} : vector<528x32xbf16> to vector<272x32xbf16>
    %37 = tpu.concatenate %28, %29, %30, %31, %32, %33, %34, %35, %36 in 1 : vector<272x32xbf16>, vector<272x32xbf16>, vector<272x32xbf16>, vector<272x32xbf16>, vector<272x32xbf16>, vector<272x32xbf16>, vector<272x32xbf16>, vector<272x32xbf16>, vector<272x32xbf16> -> vector<272x288xbf16>
    %c0_25 = arith.constant 0 : index
    %c0_26 = arith.constant 0 : index
    %38 = vector.load %arg4[%c0_25, %c0_26] : memref<288x32xbf16, #tpu.memory_space<vmem>>, vector<288x32xbf16>
    %cst_27 = arith.constant dense<0.000000e+00> : vector<272x32xf32>
    %39 = tpu.matmul %37, %38, %cst_27 {dimension_numbers = #tpu.dot_dimension_numbers<[1], [0], [0], [1], [0, 0, 1, 1], [], []>} : vector<272x288xbf16>, vector<288x32xbf16>, vector<272x32xf32> -> vector<272x32xf32>
    %40 = vector.broadcast %27 : vector<1x32xf32> to vector<272x32xf32>
    %41 = arith.addf %39, %40 : vector<272x32xf32>
    %cst_28 = arith.constant 0.000000e+00 : f32
    %42 = vector.broadcast %cst_28 : f32 to vector<272x32xf32>
    %43 = arith.maximumf %41, %42 : vector<272x32xf32>
    %44 = arith.truncf %43 : vector<272x32xf32> to vector<272x32xbf16>
    %c0_29 = arith.constant 0 : index
    %c0_30 = arith.constant 0 : index
    %45 = vector.load %arg7[%c0_29, %c0_30] : memref<1x64xf32, #tpu.memory_space<vmem>>, vector<1x64xf32>
    %46 = vector.extract_strided_slice %44 {offsets = [0, 0], sizes = [16, 32], strides = [1, 1]} : vector<272x32xbf16> to vector<16x32xbf16>
    %47 = vector.extract_strided_slice %44 {offsets = [16, 0], sizes = [16, 32], strides = [1, 1]} : vector<272x32xbf16> to vector<16x32xbf16>
    %48 = vector.extract_strided_slice %44 {offsets = [32, 0], sizes = [16, 32], strides = [1, 1]} : vector<272x32xbf16> to vector<16x32xbf16>
    %49 = vector.extract_strided_slice %44 {offsets = [112, 0], sizes = [16, 32], strides = [1, 1]} : vector<272x32xbf16> to vector<16x32xbf16>
    %50 = vector.extract_strided_slice %44 {offsets = [128, 0], sizes = [16, 32], strides = [1, 1]} : vector<272x32xbf16> to vector<16x32xbf16>
    %51 = vector.extract_strided_slice %44 {offsets = [144, 0], sizes = [16, 32], strides = [1, 1]} : vector<272x32xbf16> to vector<16x32xbf16>
    %52 = vector.extract_strided_slice %44 {offsets = [224, 0], sizes = [16, 32], strides = [1, 1]} : vector<272x32xbf16> to vector<16x32xbf16>
    %53 = vector.extract_strided_slice %44 {offsets = [240, 0], sizes = [16, 32], strides = [1, 1]} : vector<272x32xbf16> to vector<16x32xbf16>
    %54 = vector.extract_strided_slice %44 {offsets = [256, 0], sizes = [16, 32], strides = [1, 1]} : vector<272x32xbf16> to vector<16x32xbf16>
    %55 = tpu.concatenate %46, %47, %48, %49, %50, %51, %52, %53, %54 in 1 : vector<16x32xbf16>, vector<16x32xbf16>, vector<16x32xbf16>, vector<16x32xbf16>, vector<16x32xbf16>, vector<16x32xbf16>, vector<16x32xbf16>, vector<16x32xbf16>, vector<16x32xbf16> -> vector<16x288xbf16>
    %c0_31 = arith.constant 0 : index
    %c0_32 = arith.constant 0 : index
    %56 = vector.load %arg6[%c0_31, %c0_32] : memref<288x64xbf16, #tpu.memory_space<vmem>>, vector<288x64xbf16>
    %cst_33 = arith.constant dense<0.000000e+00> : vector<16x64xf32>
    %57 = tpu.matmul %55, %56, %cst_33 {dimension_numbers = #tpu.dot_dimension_numbers<[1], [0], [0], [1], [0, 0, 1, 1], [], []>} : vector<16x288xbf16>, vector<288x64xbf16>, vector<16x64xf32> -> vector<16x64xf32>
    %58 = vector.broadcast %45 : vector<1x64xf32> to vector<16x64xf32>
    %59 = arith.addf %57, %58 : vector<16x64xf32>
    %cst_34 = arith.constant 0.000000e+00 : f32
    %60 = vector.broadcast %cst_34 : f32 to vector<16x64xf32>
    %61 = arith.maximumf %59, %60 : vector<16x64xf32>
    %62 = arith.truncf %61 : vector<16x64xf32> to vector<16x64xbf16>
    %c0_35 = arith.constant 0 : index
    %c0_36 = arith.constant 0 : index
    %63 = vector.load %arg8[%c0_35, %c0_36] : memref<64x64xbf16, #tpu.memory_space<vmem>>, vector<64x64xbf16>
    %cst_37 = arith.constant dense<0.000000e+00> : vector<16x64xf32>
    %64 = tpu.matmul %62, %63, %cst_37 {dimension_numbers = #tpu.dot_dimension_numbers<[1], [0], [0], [1], [0, 0, 1, 1], [], []>} : vector<16x64xbf16>, vector<64x64xbf16>, vector<16x64xf32> -> vector<16x64xf32>
    %c0_38 = arith.constant 0 : index
    %c0_39 = arith.constant 0 : index
    %65 = vector.load %arg9[%c0_38, %c0_39] : memref<1x64xf32, #tpu.memory_space<vmem>>, vector<1x64xf32>
    %66 = vector.broadcast %65 : vector<1x64xf32> to vector<16x64xf32>
    %67 = arith.addf %64, %66 : vector<16x64xf32>
    %cst_40 = arith.constant 0.000000e+00 : f32
    %68 = vector.broadcast %cst_40 : f32 to vector<16x64xf32>
    %69 = arith.maximumf %67, %68 : vector<16x64xf32>
    %70 = arith.truncf %69 : vector<16x64xf32> to vector<16x64xbf16>
    %c0_41 = arith.constant 0 : index
    %c0_42 = arith.constant 0 : index
    %71 = vector.load %arg10[%c0_41, %c0_42] : memref<64x128xbf16, #tpu.memory_space<vmem>>, vector<64x128xbf16>
    %cst_43 = arith.constant dense<0.000000e+00> : vector<16x128xf32>
    %72 = tpu.matmul %70, %71, %cst_43 {dimension_numbers = #tpu.dot_dimension_numbers<[1], [0], [0], [1], [0, 0, 1, 1], [], []>} : vector<16x64xbf16>, vector<64x128xbf16>, vector<16x128xf32> -> vector<16x128xf32>
    %c0_44 = arith.constant 0 : index
    %c0_45 = arith.constant 0 : index
    %73 = vector.load %arg11[%c0_44, %c0_45] : memref<1x128xf32, #tpu.memory_space<vmem>>, vector<1x128xf32>
    %74 = vector.broadcast %73 : vector<1x128xf32> to vector<16x128xf32>
    %75 = arith.addf %72, %74 : vector<16x128xf32>
    %cst_46 = arith.constant 0.000000e+00 : f32
    %76 = vector.broadcast %cst_46 : f32 to vector<16x128xf32>
    %77 = arith.subf %76, %75 : vector<16x128xf32>
    %78 = math.exp %77 : vector<16x128xf32>
    %cst_47 = arith.constant 1.000000e+00 : f32
    %79 = vector.broadcast %cst_47 : f32 to vector<16x128xf32>
    %80 = arith.addf %79, %78 : vector<16x128xf32>
    %81 = tpu.reciprocal %80 {approx = true} : vector<16x128xf32> -> vector<16x128xf32>
    %82 = tpu.iota {dimensions = array<i32: 1>} : vector<16x128xi32>
    %c32_i32 = arith.constant 32 : i32
    %83 = vector.broadcast %c32_i32 : i32 to vector<16x128xi32>
    %84 = arith.cmpi eq, %82, %83 : vector<16x128xi32>
    %85 = arith.select %84, %81, %75 : vector<16x128xi1>, vector<16x128xf32>
    %c0_48 = arith.constant 0 : index
    %c0_49 = arith.constant 0 : index
    %86 = vector.load %arg12[%c0_48, %c0_49] : memref<16x128xf32, #tpu.memory_space<vmem>>, vector<16x128xf32>
    tpu.vector_store %arg12[%c0_48, %c0_49], %85 {strides = array<i32>} : memref<16x128xf32, #tpu.memory_space<vmem>>, vector<16x128xf32>,
    return
  }
  func.func @transform_0(%arg0: i32) -> (i32, i32, i32) {
    %c0_i32 = arith.constant 0 : i32
    %c0_i32_0 = arith.constant 0 : i32
    %c0_i32_1 = arith.constant 0 : i32
    return %arg0, %c0_i32, %c0_i32_0 : i32, i32, i32
  }
  func.func @transform_1(%arg0: i32) -> (i32, i32) {
    %c0_i32 = arith.constant 0 : i32
    %c0_i32_0 = arith.constant 0 : i32
    %c0_i32_1 = arith.constant 0 : i32
    return %c0_i32, %c0_i32_0 : i32, i32
  }
  func.func @transform_2(%arg0: i32) -> (i32, i32) {
    %c0_i32 = arith.constant 0 : i32
    %c0_i32_0 = arith.constant 0 : i32
    %c0_i32_1 = arith.constant 0 : i32
    return %c0_i32, %c0_i32_0 : i32, i32
  }
  func.func @transform_3(%arg0: i32) -> (i32, i32) {
    %c0_i32 = arith.constant 0 : i32
    %c0_i32_0 = arith.constant 0 : i32
    %c0_i32_1 = arith.constant 0 : i32
    return %c0_i32, %c0_i32_0 : i32, i32
  }
  func.func @transform_4(%arg0: i32) -> (i32, i32) {
    %c0_i32 = arith.constant 0 : i32
    %c0_i32_0 = arith.constant 0 : i32
    %c0_i32_1 = arith.constant 0 : i32
    return %c0_i32, %c0_i32_0 : i32, i32
  }
  func.func @transform_5(%arg0: i32) -> (i32, i32) {
    %c0_i32 = arith.constant 0 : i32
    %c0_i32_0 = arith.constant 0 : i32
    %c0_i32_1 = arith.constant 0 : i32
    return %c0_i32, %c0_i32_0 : i32, i32
  }
  func.func @transform_6(%arg0: i32) -> (i32, i32) {
    %c0_i32 = arith.constant 0 : i32
    %c0_i32_0 = arith.constant 0 : i32
    %c0_i32_1 = arith.constant 0 : i32
    return %c0_i32, %c0_i32_0 : i32, i32
  }
  func.func @transform_7(%arg0: i32) -> (i32, i32) {
    %c0_i32 = arith.constant 0 : i32
    %c0_i32_0 = arith.constant 0 : i32
    %c0_i32_1 = arith.constant 0 : i32
    return %c0_i32, %c0_i32_0 : i32, i32
  }
  func.func @transform_8(%arg0: i32) -> (i32, i32) {
    %c0_i32 = arith.constant 0 : i32
    %c0_i32_0 = arith.constant 0 : i32
    %c0_i32_1 = arith.constant 0 : i32
    return %c0_i32, %c0_i32_0 : i32, i32
  }
  func.func @transform_9(%arg0: i32) -> (i32, i32) {
    %c0_i32 = arith.constant 0 : i32
    %c0_i32_0 = arith.constant 0 : i32
    %c0_i32_1 = arith.constant 0 : i32
    return %c0_i32, %c0_i32_0 : i32, i32
  }
  func.func @transform_10(%arg0: i32) -> (i32, i32) {
    %c0_i32 = arith.constant 0 : i32
    %c0_i32_0 = arith.constant 0 : i32
    %c0_i32_1 = arith.constant 0 : i32
    return %c0_i32, %c0_i32_0 : i32, i32
  }
  func.func @transform_11(%arg0: i32) -> (i32, i32) {
    %c0_i32 = arith.constant 0 : i32
    %c0_i32_0 = arith.constant 0 : i32
    return %arg0, %c0_i32 : i32, i32
  }
}

</mosaic_0001>

<llo_original>
// kernel: visest_forward.1
$region0: #{visest_forward.1}
  #allocation0 [shape = 'u32[]', space=smem, size = 0x4, offset = 0x4, fixed_abs, tag = 'smem constant byte address 0x4 - core index']
  #allocation1 [shape = 'u32[144,128]{1,0:T(1,128)}', space=vmem, size = 0x12000, scoped, tag = 'internal scratch']
  %s0 = inlined_call_operand.vmem [shape: bf16[1,784,16], index: 0, kind: input, shape index: {}]
  %s1 = inlined_call_operand.vmem [shape: bf16[144,32], index: 1, kind: input, shape index: {}]
  %s2 = inlined_call_operand.vmem [shape: f32[1,32], index: 2, kind: input, shape index: {}]
  %s3 = inlined_call_operand.vmem [shape: bf16[288,32], index: 3, kind: input, shape index: {}]
  %s4 = inlined_call_operand.vmem [shape: f32[1,32], index: 4, kind: input, shape index: {}]
  %s5 = inlined_call_operand.vmem [shape: bf16[288,64], index: 5, kind: input, shape index: {}]
  %s6 = inlined_call_operand.vmem [shape: f32[1,64], index: 6, kind: input, shape index: {}]
  %s7 = inlined_call_operand.vmem [shape: bf16[64,64], index: 7, kind: input, shape index: {}]
  %s8 = inlined_call_operand.vmem [shape: f32[1,64], index: 8, kind: input, shape index: {}]
  %s9 = inlined_call_operand.vmem [shape: bf16[64,128], index: 9, kind: input, shape index: {}]
  %s10 = inlined_call_operand.vmem [shape: f32[1,128], index: 10, kind: input, shape index: {}]
  %s11 = inlined_call_operand.vmem [shape: f32[16,128], index: 11, kind: output, shape index: {}]
  %s12 = sld [smem:[#allocation0]]
  $region54: #{visest_forward.1} parent=0
    _
  %s14 = ssub.s32 1, %s12
  %s15 = scalar_select 0, %s14, %s12
  // Predicated region
  $region2: #{visest_forward.1} parent=0 // pred_check
    _
  $region3: #{visest_forward.1} parent=0 // pred_check_branch
    %17 = sbr.rel (0) target = $region5
  $region4: #{visest_forward.1} parent=0 // pred_region
    _
  $region5: #{visest_forward.1} parent=0 // pred_fallthru
    _
  // Predicated region
  $region6: #{visest_forward.1} parent=0 // pred_check
    _
  $region7: #{visest_forward.1} parent=0 // pred_check_branch
    %19 = sbr.rel (0) target = $region9
  $region8: #{visest_forward.1} parent=0 // pred_region
    _
  $region9: #{visest_forward.1} parent=0 // pred_fallthru
    _
  // Predicated region
  $region10: #{visest_forward.1} parent=0 // pred_check
    _
  $region11: #{visest_forward.1} parent=0 // pred_check_branch
    %21 = sbr.rel (0) target = $region13
  $region12: #{visest_forward.1} parent=0 // pred_region
    _
  $region13: #{visest_forward.1} parent=0 // pred_fallthru
    _
  // Predicated region
  $region14: #{visest_forward.1} parent=0 // pred_check
    _
  $region15: #{visest_forward.1} parent=0 // pred_check_branch
    %23 = sbr.rel (0) target = $region17
  $region16: #{visest_forward.1} parent=0 // pred_region
    _
  $region17: #{visest_forward.1} parent=0 // pred_fallthru
    _
  // Predicated region
  $region18: #{visest_forward.1} parent=0 // pred_check
    _
  $region19: #{visest_forward.1} parent=0 // pred_check_branch
    %25 = sbr.rel (0) target = $region21
  $region20: #{visest_forward.1} parent=0 // pred_region
    _
  $region21: #{visest_forward.1} parent=0 // pred_fallthru
    _
  // Predicated region
  $region22: #{visest_forward.1} parent=0 // pred_check
    _
  $region23: #{visest_forward.1} parent=0 // pred_check_branch
    %27 = sbr.rel (0) target = $region25
  $region24: #{visest_forward.1} parent=0 // pred_region
    _
  $region25: #{visest_forward.1} parent=0 // pred_fallthru
    _
  // Predicated region
  $region26: #{visest_forward.1} parent=0 // pred_check
    _
  $region27: #{visest_forward.1} parent=0 // pred_check_branch
    %29 = sbr.rel (0) target = $region29
  $region28: #{visest_forward.1} parent=0 // pred_region
    _
  $region29: #{visest_forward.1} parent=0 // pred_fallthru
    _
  // Predicated region
  $region30: #{visest_forward.1} parent=0 // pred_check
    _
  $region31: #{visest_forward.1} parent=0 // pred_check_branch
    %31 = sbr.rel (0) target = $region33
  $region32: #{visest_forward.1} parent=0 // pred_region
    _
  $region33: #{visest_forward.1} parent=0 // pred_fallthru
    _
  // Predicated region
  $region34: #{visest_forward.1} parent=0 // pred_check
    _
  $region35: #{visest_forward.1} parent=0 // pred_check_branch
    %33 = sbr.rel (0) target = $region37
  $region36: #{visest_forward.1} parent=0 // pred_region
    _
  $region37: #{visest_forward.1} parent=0 // pred_fallthru
    _
  // Predicated region
  $region38: #{visest_forward.1} parent=0 // pred_check
    _
  $region39: #{visest_forward.1} parent=0 // pred_check_branch
    %35 = sbr.rel (0) target = $region41
  $region40: #{visest_forward.1} parent=0 // pred_region
    _
  $region41: #{visest_forward.1} parent=0 // pred_fallthru
    _
  // Predicated region
  $region42: #{visest_forward.1} parent=0 // pred_check
    _
  $region43: #{visest_forward.1} parent=0 // pred_check_branch
    %37 = sbr.rel (0) target = $region45
  $region44: #{visest_forward.1} parent=0 // pred_region
    _
  $region45: #{visest_forward.1} parent=0 // pred_fallthru
    _
  %v39 = vld [vmem:[%s2] sm:$0x1]
  %v40 = vld [vmem:[%s0] sm:$0xf]
  %v41 = vld [vmem:[%s0 + $0x4] sm:$0xf]
  %v42 = vld [vmem:[%s0 + $0x8] sm:$0xf]
  %v43 = vld [vmem:[%s0 + $0xc] sm:$0xf]
  %v44 = vld [vmem:[%s0 + $0x10] sm:$0xf]
  %v45 = vld [vmem:[%s0 + $0x14] sm:$0xf]
  %v46 = vld [vmem:[%s0 + $0x18] sm:$0xf]
  %v47 = vld [vmem:[%s0 + $0x1c] sm:$0xf]
  %v48 = vld [vmem:[%s0 + $0x20] sm:$0xf]
  %v49 = vld [vmem:[%s0 + $0x24] sm:$0xf]
  %v50 = vld [vmem:[%s0 + $0x28] sm:$0xf]
  %v51 = vld [vmem:[%s0 + $0x2c] sm:$0xf]
  %v52 = vld [vmem:[%s0 + $0x30] sm:$0xf]
  %v53 = vld [vmem:[%s0 + $0x34] sm:$0xf]
  %v54 = vld [vmem:[%s0 + $0x38] sm:$0xf]
  %v55 = vld [vmem:[%s0 + $0x3c] sm:$0xf]
  %v56 = vld [vmem:[%s0 + $0x40] sm:$0xf]
  %v57 = vld [vmem:[%s0 + $0x44] sm:$0xf]
  %v58 = vld [vmem:[%s0 + $0x48] sm:$0xf]
  %v59 = vld [vmem:[%s0 + $0x4c] sm:$0xf]
  %v60 = vld [vmem:[%s0 + $0x50] sm:$0xf]
  %v61 = vld [vmem:[%s0 + $0x54] sm:$0xf]
  %v62 = vld [vmem:[%s0 + $0x58] sm:$0xf]
  %v63 = vld [vmem:[%s0 + $0x5c] sm:$0xf]
  %v64 = vld [vmem:[%s0 + $0x60] sm:$0xf]
  %v65 = vld [vmem:[%s0 + $0x64] sm:$0xf]
  %v66 = vld [vmem:[%s0 + $0x68] sm:$0xf]
  %v67 = vld [vmem:[%s0 + $0x6c] sm:$0xf]
  %v68 = vld [vmem:[%s0 + $0x70] sm:$0xf]
  %v69 = vld [vmem:[%s0 + $0x74] sm:$0xf]
  %v70 = vld [vmem:[%s0 + $0x78] sm:$0xf]
  %v71 = vld [vmem:[%s0 + $0x7c] sm:$0xf]
  %v72 = vld [vmem:[%s0 + $0x80] sm:$0xf]
  %v73 = vld [vmem:[%s0 + $0x84] sm:$0xf]
  %v74 = vld [vmem:[%s0 + $0x88] sm:$0xf]
  %v75 = vld [vmem:[%s0 + $0x8c] sm:$0xf]
  %v76 = vld [vmem:[%s0 + $0x90] sm:$0xf]
  %v77 = vld [vmem:[%s0 + $0x94] sm:$0xf]
  %v78 = vld [vmem:[%s0 + $0x98] sm:$0xf]
  %v79 = vld [vmem:[%s0 + $0x9c] sm:$0xf]
  %v80 = vld [vmem:[%s0 + $0xa0] sm:$0xf]
  %v81 = vld [vmem:[%s0 + $0xa4] sm:$0xf]
  %v82 = vld [vmem:[%s0 + $0xa8] sm:$0xf]
  %v83 = vld [vmem:[%s0 + $0xac] sm:$0xf]
  %v84 = vld [vmem:[%s0 + $0xb0] sm:$0xf]
  %v85 = vld [vmem:[%s0 + $0xb4] sm:$0xf]
  %v86 = vld [vmem:[%s0 + $0xb8] sm:$0xf]
  %v87 = vld [vmem:[%s0 + $0xbc] sm:$0xf]
  %v88 = vld [vmem:[%s0 + $0xc0] sm:$0xf]
  %v89 = vld [vmem:[%s0 + $0xc4] sm:$0xf]
  %v90 = vld [vmem:[%s0 + $0xc8] sm:$0xf]
  %v91 = vld [vmem:[%s0 + $0xcc] sm:$0xf]
  %v92 = vld [vmem:[%s0 + $0xd0] sm:$0xf]
  %v93 = vld [vmem:[%s0 + $0xd4] sm:$0xf]
  %v94 = vld [vmem:[%s0 + $0xd8] sm:$0xf]
  %v95 = vld [vmem:[%s0 + $0xdc] sm:$0xf]
  %v96 = vld [vmem:[%s0 + $0xe0] sm:$0xf]
  %v97 = vld [vmem:[%s0 + $0xe4] sm:$0xf]
  %v98 = vld [vmem:[%s0 + $0xe8] sm:$0xf]
  %v99 = vld [vmem:[%s0 + $0xec] sm:$0xf]
  %v100 = vld [vmem:[%s0 + $0xf0] sm:$0xf]
  %v101 = vld [vmem:[%s0 + $0xf4] sm:$0xf]
  %v102 = vld [vmem:[%s0 + $0xf8] sm:$0xf]
  %v103 = vld [vmem:[%s0 + $0xfc] sm:$0xf]
  %v104 = vld [vmem:[%s0 + $0x100] sm:$0xf]
  %v105 = vld [vmem:[%s0 + $0x104] sm:$0xf]
  %v106 = vld [vmem:[%s0 + $0x108] sm:$0xf]
  %v107 = vld [vmem:[%s0 + $0x10c] sm:$0xf]
  %v108 = vld [vmem:[%s0 + $0x110] sm:$0xf]
  %v109 = vld [vmem:[%s0 + $0x114] sm:$0xf]
  %v110 = vld [vmem:[%s0 + $0x118] sm:$0xf]
  %v111 = vld [vmem:[%s0 + $0x11c] sm:$0xf]
  %v112 = vld [vmem:[%s0 + $0x120] sm:$0xf]
  %v113 = vld [vmem:[%s0 + $0x124] sm:$0xf]
  %v114 = vld [vmem:[%s0 + $0x128] sm:$0xf]
  %v115 = vld [vmem:[%s0 + $0x12c] sm:$0xf]
  %v116 = vld [vmem:[%s0 + $0x130] sm:$0xf]
  %v117 = vld [vmem:[%s0 + $0x134] sm:$0xf]
  %v118 = vld [vmem:[%s0 + $0x138] sm:$0xf]
  %v119 = vld [vmem:[%s0 + $0x13c] sm:$0xf]
  %v120 = vld [vmem:[%s0 + $0x140] sm:$0xf]
  %v121 = vld [vmem:[%s0 + $0x144] sm:$0xf]
  %v122 = vld [vmem:[%s0 + $0x148] sm:$0xf]
  %v123 = vld [vmem:[%s0 + $0x14c] sm:$0xf]
  %v124 = vld [vmem:[%s0 + $0x150] sm:$0xf]
  %v125 = vld [vmem:[%s0 + $0x154] sm:$0xf]
  %v126 = vld [vmem:[%s0 + $0x158] sm:$0xf]
  %v127 = vld [vmem:[%s0 + $0x15c] sm:$0xf]
  %v128 = vld [vmem:[%s0 + $0x160] sm:$0xf]
  %v129 = vld [vmem:[%s0 + $0x164] sm:$0xf]
  %v130 = vld [vmem:[%s0 + $0x168] sm:$0xf]
  %v131 = vld [vmem:[%s0 + $0x16c] sm:$0xf]
  %v132 = vld [vmem:[%s0 + $0x170] sm:$0xf]
  %v133 = vld [vmem:[%s0 + $0x174] sm:$0xf]
  %v134 = vld [vmem:[%s0 + $0x178] sm:$0xf]
  %v135 = vld [vmem:[%s0 + $0x17c] sm:$0xf]
  %v136 = vld [vmem:[%s0 + $0x180] sm:$0xf]
  %v137 = vld [vmem:[%s0 + $0x184] sm:$0xf]
  %v204 = vunpack.c.l.b16 %v40
  %v205 = vunpack.c.l.b16 %v41
  %v206 = vunpack.c.l.b16 %v42
  %v207 = vunpack.c.l.b16 %v43
  %v208 = vunpack.c.l.b16 %v44
  %v209 = vunpack.c.l.b16 %v45
  %v210 = vunpack.c.l.b16 %v46
  %v211 = vunpack.c.l.b16 %v47
  %v212 = vunpack.c.l.b16 %v48
  %v213 = vunpack.c.l.b16 %v49
  %v214 = vunpack.c.l.b16 %v50
  %v215 = vunpack.c.l.b16 %v51
  %v216 = vunpack.c.l.b16 %v52
  %v217 = vunpack.c.l.b16 %v53
  %v218 = vunpack.c.l.b16 %v54
  %v219 = vunpack.c.l.b16 %v55
  %v220 = vunpack.c.l.b16 %v56
  %v221 = vunpack.c.l.b16 %v57
  %v222 = vunpack.c.l.b16 %v58
  %v223 = vunpack.c.l.b16 %v59
  %v224 = vunpack.c.l.b16 %v60
  %v225 = vunpack.c.l.b16 %v61
  %v226 = vunpack.c.l.b16 %v62
  %v227 = vunpack.c.l.b16 %v63
  %v228 = vunpack.c.l.b16 %v64
  %v229 = vunpack.c.l.b16 %v65
  %v230 = vunpack.c.l.b16 %v66
  %v231 = vunpack.c.l.b16 %v67
  %v232 = vunpack.c.l.b16 %v68
  %v233 = vunpack.c.l.b16 %v69
  %v234 = vunpack.c.l.b16 %v70
  %v235 = vunpack.c.l.b16 %v71
  %v236 = vunpack.c.l.b16 %v72
  %v237 = vunpack.c.l.b16 %v73
  %v238 = vunpack.c.l.b16 %v74
  %v239 = vunpack.c.l.b16 %v75
  %v240 = vunpack.c.l.b16 %v76
  %v241 = vunpack.c.l.b16 %v77
  %v242 = vunpack.c.l.b16 %v78
  %v243 = vunpack.c.l.b16 %v79
  %v244 = vunpack.c.l.b16 %v80
  %v245 = vunpack.c.l.b16 %v81
  %v246 = vunpack.c.l.b16 %v82
  %v247 = vunpack.c.l.b16 %v83
  %v248 = vunpack.c.l.b16 %v84
  %v249 = vunpack.c.l.b16 %v85
  %v250 = vunpack.c.l.b16 %v86
  %v251 = vunpack.c.l.b16 %v87
  %v252 = vunpack.c.l.b16 %v88
  %v253 = vunpack.c.l.b16 %v89
  %v254 = vunpack.c.l.b16 %v90
  %v255 = vunpack.c.l.b16 %v91
  %v256 = vunpack.c.l.b16 %v92
  %v257 = vunpack.c.l.b16 %v93
  %v258 = vunpack.c.l.b16 %v94
  %v259 = vunpack.c.l.b16 %v95
  %v260 = vunpack.c.l.b16 %v96
  %v261 = vunpack.c.l.b16 %v97
  %v262 = vunpack.c.l.b16 %v98
  %v263 = vunpack.c.l.b16 %v99
  %v264 = vunpack.c.l.b16 %v100
  %v265 = vunpack.c.l.b16 %v101
  %v266 = vunpack.c.l.b16 %v102
  %v267 = vunpack.c.l.b16 %v103
  %v268 = vunpack.c.l.b16 %v104
  %v269 = vunpack.c.l.b16 %v105
  %v270 = vpack.c.b16 %v205, %v204
  %v271 = vpack.c.b16 %v207, %v206
  %v272 = vpack.c.b16 %v209, %v208
  %v273 = vpack.c.b16 %v211, %v210
  %v274 = vpack.c.b16 %v213, %v212
  %v275 = vpack.c.b16 %v215, %v214
  %v276 = vpack.c.b16 %v217, %v216
  %v277 = vpack.c.b16 %v219, %v218
  %v278 = vpack.c.b16 %v221, %v220
  %v279 = vpack.c.b16 %v223, %v222
  %v280 = vpack.c.b16 %v225, %v224
  %v281 = vpack.c.b16 %v227, %v226
  %v282 = vpack.c.b16 %v229, %v228
  %v283 = vpack.c.b16 %v231, %v230
  %v284 = vpack.c.b16 %v233, %v232
  %v285 = vpack.c.b16 %v235, %v234
  %v286 = vpack.c.b16 %v237, %v236
  %v287 = vpack.c.b16 %v239, %v238
  %v288 = vpack.c.b16 %v241, %v240
  %v289 = vpack.c.b16 %v243, %v242
  %v290 = vpack.c.b16 %v245, %v244
  %v291 = vpack.c.b16 %v247, %v246
  %v292 = vpack.c.b16 %v249, %v248
  %v293 = vpack.c.b16 %v251, %v250
  %v294 = vpack.c.b16 %v253, %v252
  %v295 = vpack.c.b16 %v255, %v254
  %v296 = vpack.c.b16 %v257, %v256
  %v297 = vpack.c.b16 %v259, %v258
  %v298 = vpack.c.b16 %v261, %v260
  %v299 = vpack.c.b16 %v263, %v262
  %v300 = vpack.c.b16 %v265, %v264
  %v301 = vpack.c.b16 %v267, %v266
  %v302 = vpack.c.b16 %v269, %v268
  %v305 = vunpack.c.l.b16 %v106
  %v306 = vunpack.c.l.b16 %v107
  %v307 = vpack.c.b16 %v306, %v305
  %308 = vrot.lane.b32.xlu0 %v271, 16
  %v309 = vpop.permute.xlu0 %308
  %310 = vrot.lane.b32.xlu0 %v272, 16
  %v311 = vpop.permute.xlu0 %310
  %312 = vrot.lane.b32.xlu0 %v273, 16
  %v313 = vpop.permute.xlu0 %312
  %314 = vrot.lane.b32.xlu0 %v274, 16
  %v315 = vpop.permute.xlu0 %314
  %316 = vrot.lane.b32.xlu0 %v275, 16
  %v317 = vpop.permute.xlu0 %316
  %318 = vrot.lane.b32.xlu0 %v276, 16
  %v319 = vpop.permute.xlu0 %318
  %320 = vrot.lane.b32.xlu0 %v277, 16
  %v321 = vpop.permute.xlu0 %320
  %322 = vrot.lane.b32.xlu0 %v278, 16
  %v323 = vpop.permute.xlu0 %322
  %324 = vrot.lane.b32.xlu0 %v279, 16
  %v325 = vpop.permute.xlu0 %324
  %326 = vrot.lane.b32.xlu0 %v280, 16
  %v327 = vpop.permute.xlu0 %326
  %328 = vrot.lane.b32.xlu0 %v281, 16
  %v329 = vpop.permute.xlu0 %328
  %330 = vrot.lane.b32.xlu0 %v282, 16
  %v331 = vpop.permute.xlu0 %330
  %332 = vrot.lane.b32.xlu0 %v283, 16
  %v333 = vpop.permute.xlu0 %332
  %334 = vrot.lane.b32.xlu0 %v284, 16
  %v335 = vpop.permute.xlu0 %334
  %336 = vrot.lane.b32.xlu0 %v285, 16
  %v337 = vpop.permute.xlu0 %336
  %338 = vrot.lane.b32.xlu0 %v286, 16
  %v339 = vpop.permute.xlu0 %338
  %340 = vrot.lane.b32.xlu0 %v287, 16
  %v341 = vpop.permute.xlu0 %340
  %342 = vrot.lane.b32.xlu0 %v288, 16
  %v343 = vpop.permute.xlu0 %342
  %344 = vrot.lane.b32.xlu0 %v289, 16
  %v345 = vpop.permute.xlu0 %344
  %346 = vrot.lane.b32.xlu0 %v290, 16
  %v347 = vpop.permute.xlu0 %346
  %348 = vrot.lane.b32.xlu0 %v291, 16
  %v349 = vpop.permute.xlu0 %348
  %350 = vrot.lane.b32.xlu0 %v292, 16
  %v351 = vpop.permute.xlu0 %350
  %352 = vrot.lane.b32.xlu0 %v293, 16
  %v353 = vpop.permute.xlu0 %352
  %354 = vrot.lane.b32.xlu0 %v294, 16
  %v355 = vpop.permute.xlu0 %354
  %356 = vrot.lane.b32.xlu0 %v295, 16
  %v357 = vpop.permute.xlu0 %356
  %358 = vrot.lane.b32.xlu0 %v296, 16
  %v359 = vpop.permute.xlu0 %358
  %360 = vrot.lane.b32.xlu0 %v297, 16
  %v361 = vpop.permute.xlu0 %360
  %362 = vrot.lane.b32.xlu0 %v298, 16
  %v363 = vpop.permute.xlu0 %362
  %364 = vrot.lane.b32.xlu0 %v299, 16
  %v365 = vpop.permute.xlu0 %364
  %366 = vrot.lane.b32.xlu0 %v300, 16
  %v367 = vpop.permute.xlu0 %366
  %368 = vrot.lane.b32.xlu0 %v301, 16
  %v369 = vpop.permute.xlu0 %368
  %370 = vrot.lane.b32.xlu0 %v302, 16
  %v371 = vpop.permute.xlu0 %370
  %372 = vrot.lane.b32.xlu0 %v307, 16
  %v373 = vpop.permute.xlu0 %372
  %v376 = vunpack.c.l.b16 %v108
  %v377 = vunpack.c.l.b16 %v109
  %v378 = vpack.c.b16 %v377, %v376
  %379 = vrot.lane.b32.xlu0 %v272, 32
  %v380 = vpop.permute.xlu0 %379
  %381 = vrot.lane.b32.xlu0 %v273, 32
  %v382 = vpop.permute.xlu0 %381
  %383 = vrot.lane.b32.xlu0 %v274, 32
  %v384 = vpop.permute.xlu0 %383
  %385 = vrot.lane.b32.xlu0 %v275, 32
  %v386 = vpop.permute.xlu0 %385
  %387 = vrot.lane.b32.xlu0 %v276, 32
  %v388 = vpop.permute.xlu0 %387
  %389 = vrot.lane.b32.xlu0 %v277, 32
  %v390 = vpop.permute.xlu0 %389
  %391 = vrot.lane.b32.xlu0 %v278, 32
  %v392 = vpop.permute.xlu0 %391
  %393 = vrot.lane.b32.xlu0 %v279, 32
  %v394 = vpop.permute.xlu0 %393
  %395 = vrot.lane.b32.xlu0 %v280, 32
  %v396 = vpop.permute.xlu0 %395
  %397 = vrot.lane.b32.xlu0 %v281, 32
  %v398 = vpop.permute.xlu0 %397
  %399 = vrot.lane.b32.xlu0 %v282, 32
  %v400 = vpop.permute.xlu0 %399
  %401 = vrot.lane.b32.xlu0 %v283, 32
  %v402 = vpop.permute.xlu0 %401
  %403 = vrot.lane.b32.xlu0 %v284, 32
  %v404 = vpop.permute.xlu0 %403
  %405 = vrot.lane.b32.xlu0 %v285, 32
  %v406 = vpop.permute.xlu0 %405
  %407 = vrot.lane.b32.xlu0 %v286, 32
  %v408 = vpop.permute.xlu0 %407
  %409 = vrot.lane.b32.xlu0 %v287, 32
  %v410 = vpop.permute.xlu0 %409
  %411 = vrot.lane.b32.xlu0 %v288, 32
  %v412 = vpop.permute.xlu0 %411
  %413 = vrot.lane.b32.xlu0 %v289, 32
  %v414 = vpop.permute.xlu0 %413
  %415 = vrot.lane.b32.xlu0 %v290, 32
  %v416 = vpop.permute.xlu0 %415
  %417 = vrot.lane.b32.xlu0 %v291, 32
  %v418 = vpop.permute.xlu0 %417
  %419 = vrot.lane.b32.xlu0 %v292, 32
  %v420 = vpop.permute.xlu0 %419
  %421 = vrot.lane.b32.xlu0 %v293, 32
  %v422 = vpop.permute.xlu0 %421
  %423 = vrot.lane.b32.xlu0 %v294, 32
  %v424 = vpop.permute.xlu0 %423
  %425 = vrot.lane.b32.xlu0 %v295, 32
  %v426 = vpop.permute.xlu0 %425
  %427 = vrot.lane.b32.xlu0 %v296, 32
  %v428 = vpop.permute.xlu0 %427
  %429 = vrot.lane.b32.xlu0 %v297, 32
  %v430 = vpop.permute.xlu0 %429
  %431 = vrot.lane.b32.xlu0 %v298, 32
  %v432 = vpop.permute.xlu0 %431
  %433 = vrot.lane.b32.xlu0 %v299, 32
  %v434 = vpop.permute.xlu0 %433
  %435 = vrot.lane.b32.xlu0 %v300, 32
  %v436 = vpop.permute.xlu0 %435
  %437 = vrot.lane.b32.xlu0 %v301, 32
  %v438 = vpop.permute.xlu0 %437
  %439 = vrot.lane.b32.xlu0 %v302, 32
  %v440 = vpop.permute.xlu0 %439
  %441 = vrot.lane.b32.xlu0 %v307, 32
  %v442 = vpop.permute.xlu0 %441
  %443 = vrot.lane.b32.xlu0 %v378, 32
  %v444 = vpop.permute.xlu0 %443
  %v455 = vunpack.c.l.b16 %v110
  %v456 = vunpack.c.l.b16 %v111
  %v457 = vunpack.c.l.b16 %v112
  %v458 = vunpack.c.l.b16 %v113
  %v459 = vunpack.c.l.b16 %v114
  %v460 = vunpack.c.l.b16 %v115
  %v461 = vunpack.c.l.b16 %v116
  %v462 = vunpack.c.l.b16 %v117
  %v463 = vunpack.c.l.b16 %v118
  %v464 = vunpack.c.l.b16 %v119
  %v465 = vpack.c.b16 %v456, %v455
  %v466 = vpack.c.b16 %v458, %v457
  %v467 = vpack.c.b16 %v460, %v459
  %v468 = vpack.c.b16 %v462, %v461
  %v469 = vpack.c.b16 %v464, %v463
  %470 = vrot.lane.b32.xlu0 %v277, 48
  %v471 = vpop.permute.xlu0 %470
  %472 = vrot.lane.b32.xlu0 %v278, 48
  %v473 = vpop.permute.xlu0 %472
  %474 = vrot.lane.b32.xlu0 %v279, 48
  %v475 = vpop.permute.xlu0 %474
  %476 = vrot.lane.b32.xlu0 %v280, 48
  %v477 = vpop.permute.xlu0 %476
  %478 = vrot.lane.b32.xlu0 %v281, 48
  %v479 = vpop.permute.xlu0 %478
  %480 = vrot.lane.b32.xlu0 %v282, 48
  %v481 = vpop.permute.xlu0 %480
  %482 = vrot.lane.b32.xlu0 %v283, 48
  %v483 = vpop.permute.xlu0 %482
  %484 = vrot.lane.b32.xlu0 %v284, 48
  %v485 = vpop.permute.xlu0 %484
  %486 = vrot.lane.b32.xlu0 %v285, 48
  %v487 = vpop.permute.xlu0 %486
  %488 = vrot.lane.b32.xlu0 %v286, 48
  %v489 = vpop.permute.xlu0 %488
  %490 = vrot.lane.b32.xlu0 %v287, 48
  %v491 = vpop.permute.xlu0 %490
  %492 = vrot.lane.b32.xlu0 %v288, 48
  %v493 = vpop.permute.xlu0 %492
  %494 = vrot.lane.b32.xlu0 %v289, 48
  %v495 = vpop.permute.xlu0 %494
  %496 = vrot.lane.b32.xlu0 %v290, 48
  %v497 = vpop.permute.xlu0 %496
  %498 = vrot.lane.b32.xlu0 %v291, 48
  %v499 = vpop.permute.xlu0 %498
  %500 = vrot.lane.b32.xlu0 %v292, 48
  %v501 = vpop.permute.xlu0 %500
  %502 = vrot.lane.b32.xlu0 %v293, 48
  %v503 = vpop.permute.xlu0 %502
  %504 = vrot.lane.b32.xlu0 %v294, 48
  %v505 = vpop.permute.xlu0 %504
  %506 = vrot.lane.b32.xlu0 %v295, 48
  %v507 = vpop.permute.xlu0 %506
  %508 = vrot.lane.b32.xlu0 %v296, 48
  %v509 = vpop.permute.xlu0 %508
  %510 = vrot.lane.b32.xlu0 %v297, 48
  %v511 = vpop.permute.xlu0 %510
  %512 = vrot.lane.b32.xlu0 %v298, 48
  %v513 = vpop.permute.xlu0 %512
  %514 = vrot.lane.b32.xlu0 %v299, 48
  %v515 = vpop.permute.xlu0 %514
  %516 = vrot.lane.b32.xlu0 %v300, 48
  %v517 = vpop.permute.xlu0 %516
  %518 = vrot.lane.b32.xlu0 %v301, 48
  %v519 = vpop.permute.xlu0 %518
  %520 = vrot.lane.b32.xlu0 %v302, 48
  %v521 = vpop.permute.xlu0 %520
  %522 = vrot.lane.b32.xlu0 %v307, 48
  %v523 = vpop.permute.xlu0 %522
  %524 = vrot.lane.b32.xlu0 %v378, 48
  %v525 = vpop.permute.xlu0 %524
  %526 = vrot.lane.b32.xlu0 %v465, 48
  %v527 = vpop.permute.xlu0 %526
  %528 = vrot.lane.b32.xlu0 %v466, 48
  %v529 = vpop.permute.xlu0 %528
  %530 = vrot.lane.b32.xlu0 %v467, 48
  %v531 = vpop.permute.xlu0 %530
  %532 = vrot.lane.b32.xlu0 %v468, 48
  %v533 = vpop.permute.xlu0 %532
  %534 = vrot.lane.b32.xlu0 %v469, 48
  %v535 = vpop.permute.xlu0 %534
  %v538 = vunpack.c.l.b16 %v120
  %v539 = vunpack.c.l.b16 %v121
  %v540 = vpack.c.b16 %v539, %v538
  %541 = vrot.lane.b32.xlu0 %v278, 64
  %v542 = vpop.permute.xlu0 %541
  %543 = vrot.lane.b32.xlu0 %v279, 64
  %v544 = vpop.permute.xlu0 %543
  %545 = vrot.lane.b32.xlu0 %v280, 64
  %v546 = vpop.permute.xlu0 %545
  %547 = vrot.lane.b32.xlu0 %v281, 64
  %v548 = vpop.permute.xlu0 %547
  %549 = vrot.lane.b32.xlu0 %v282, 64
  %v550 = vpop.permute.xlu0 %549
  %551 = vrot.lane.b32.xlu0 %v283, 64
  %v552 = vpop.permute.xlu0 %551
  %553 = vrot.lane.b32.xlu0 %v284, 64
  %v554 = vpop.permute.xlu0 %553
  %555 = vrot.lane.b32.xlu0 %v285, 64
  %v556 = vpop.permute.xlu0 %555
  %557 = vrot.lane.b32.xlu0 %v286, 64
  %v558 = vpop.permute.xlu0 %557
  %559 = vrot.lane.b32.xlu0 %v287, 64
  %v560 = vpop.permute.xlu0 %559
  %561 = vrot.lane.b32.xlu0 %v288, 64
  %v562 = vpop.permute.xlu0 %561
  %563 = vrot.lane.b32.xlu0 %v289, 64
  %v564 = vpop.permute.xlu0 %563
  %565 = vrot.lane.b32.xlu0 %v290, 64
  %v566 = vpop.permute.xlu0 %565
  %567 = vrot.lane.b32.xlu0 %v291, 64
  %v568 = vpop.permute.xlu0 %567
  %569 = vrot.lane.b32.xlu0 %v292, 64
  %v570 = vpop.permute.xlu0 %569
  %571 = vrot.lane.b32.xlu0 %v293, 64
  %v572 = vpop.permute.xlu0 %571
  %573 = vrot.lane.b32.xlu0 %v294, 64
  %v574 = vpop.permute.xlu0 %573
  %575 = vrot.lane.b32.xlu0 %v295, 64
  %v576 = vpop.permute.xlu0 %575
  %577 = vrot.lane.b32.xlu0 %v296, 64
  %v578 = vpop.permute.xlu0 %577
  %579 = vrot.lane.b32.xlu0 %v297, 64
  %v580 = vpop.permute.xlu0 %579
  %581 = vrot.lane.b32.xlu0 %v298, 64
  %v582 = vpop.permute.xlu0 %581
  %583 = vrot.lane.b32.xlu0 %v299, 64
  %v584 = vpop.permute.xlu0 %583
  %585 = vrot.lane.b32.xlu0 %v300, 64
  %v586 = vpop.permute.xlu0 %585
  %587 = vrot.lane.b32.xlu0 %v301, 64
  %v588 = vpop.permute.xlu0 %587
  %589 = vrot.lane.b32.xlu0 %v302, 64
  %v590 = vpop.permute.xlu0 %589
  %591 = vrot.lane.b32.xlu0 %v307, 64
  %v592 = vpop.permute.xlu0 %591
  %593 = vrot.lane.b32.xlu0 %v378, 64
  %v594 = vpop.permute.xlu0 %593
  %595 = vrot.lane.b32.xlu0 %v465, 64
  %v596 = vpop.permute.xlu0 %595
  %597 = vrot.lane.b32.xlu0 %v466, 64
  %v598 = vpop.permute.xlu0 %597
  %599 = vrot.lane.b32.xlu0 %v467, 64
  %v600 = vpop.permute.xlu0 %599
  %601 = vrot.lane.b32.xlu0 %v468, 64
  %v602 = vpop.permute.xlu0 %601
  %603 = vrot.lane.b32.xlu0 %v469, 64
  %v604 = vpop.permute.xlu0 %603
  %605 = vrot.lane.b32.xlu0 %v540, 64
  %v606 = vpop.permute.xlu0 %605
  %v609 = vunpack.c.l.b16 %v122
  %v610 = vunpack.c.l.b16 %v123
  %v611 = vpack.c.b16 %v610, %v609
  %612 = vrot.lane.b32.xlu0 %v279, 80
  %v613 = vpop.permute.xlu0 %612
  %614 = vrot.lane.b32.xlu0 %v280, 80
  %v615 = vpop.permute.xlu0 %614
  %616 = vrot.lane.b32.xlu0 %v281, 80
  %v617 = vpop.permute.xlu0 %616
  %618 = vrot.lane.b32.xlu0 %v282, 80
  %v619 = vpop.permute.xlu0 %618
  %620 = vrot.lane.b32.xlu0 %v283, 80
  %v621 = vpop.permute.xlu0 %620
  %622 = vrot.lane.b32.xlu0 %v284, 80
  %v623 = vpop.permute.xlu0 %622
  %624 = vrot.lane.b32.xlu0 %v285, 80
  %v625 = vpop.permute.xlu0 %624
  %626 = vrot.lane.b32.xlu0 %v286, 80
  %v627 = vpop.permute.xlu0 %626
  %628 = vrot.lane.b32.xlu0 %v287, 80
  %v629 = vpop.permute.xlu0 %628
  %630 = vrot.lane.b32.xlu0 %v288, 80
  %v631 = vpop.permute.xlu0 %630
  %632 = vrot.lane.b32.xlu0 %v289, 80
  %v633 = vpop.permute.xlu0 %632
  %634 = vrot.lane.b32.xlu0 %v290, 80
  %v635 = vpop.permute.xlu0 %634
  %636 = vrot.lane.b32.xlu0 %v291, 80
  %v637 = vpop.permute.xlu0 %636
  %638 = vrot.lane.b32.xlu0 %v292, 80
  %v639 = vpop.permute.xlu0 %638
  %640 = vrot.lane.b32.xlu0 %v293, 80
  %v641 = vpop.permute.xlu0 %640
  %642 = vrot.lane.b32.xlu0 %v294, 80
  %v643 = vpop.permute.xlu0 %642
  %644 = vrot.lane.b32.xlu0 %v295, 80
  %v645 = vpop.permute.xlu0 %644
  %646 = vrot.lane.b32.xlu0 %v296, 80
  %v647 = vpop.permute.xlu0 %646
  %648 = vrot.lane.b32.xlu0 %v297, 80
  %v649 = vpop.permute.xlu0 %648
  %650 = vrot.lane.b32.xlu0 %v298, 80
  %v651 = vpop.permute.xlu0 %650
  %652 = vrot.lane.b32.xlu0 %v299, 80
  %v653 = vpop.permute.xlu0 %652
  %654 = vrot.lane.b32.xlu0 %v300, 80
  %v655 = vpop.permute.xlu0 %654
  %656 = vrot.lane.b32.xlu0 %v301, 80
  %v657 = vpop.permute.xlu0 %656
  %658 = vrot.lane.b32.xlu0 %v302, 80
  %v659 = vpop.permute.xlu0 %658
  %660 = vrot.lane.b32.xlu0 %v307, 80
  %v661 = vpop.permute.xlu0 %660
  %662 = vrot.lane.b32.xlu0 %v378, 80
  %v663 = vpop.permute.xlu0 %662
  %664 = vrot.lane.b32.xlu0 %v465, 80
  %v665 = vpop.permute.xlu0 %664
  %666 = vrot.lane.b32.xlu0 %v466, 80
  %v667 = vpop.permute.xlu0 %666
  %668 = vrot.lane.b32.xlu0 %v467, 80
  %v669 = vpop.permute.xlu0 %668
  %670 = vrot.lane.b32.xlu0 %v468, 80
  %v671 = vpop.permute.xlu0 %670
  %672 = vrot.lane.b32.xlu0 %v469, 80
  %v673 = vpop.permute.xlu0 %672
  %674 = vrot.lane.b32.xlu0 %v540, 80
  %v675 = vpop.permute.xlu0 %674
  %676 = vrot.lane.b32.xlu0 %v611, 80
  %v677 = vpop.permute.xlu0 %676
  %v688 = vunpack.c.l.b16 %v124
  %v689 = vunpack.c.l.b16 %v125
  %v690 = vunpack.c.l.b16 %v126
  %v691 = vunpack.c.l.b16 %v127
  %v692 = vunpack.c.l.b16 %v128
  %v693 = vunpack.c.l.b16 %v129
  %v694 = vunpack.c.l.b16 %v130
  %v695 = vunpack.c.l.b16 %v131
  %v696 = vunpack.c.l.b16 %v132
  %v697 = vunpack.c.l.b16 %v133
  %v698 = vpack.c.b16 %v689, %v688
  %v699 = vpack.c.b16 %v691, %v690
  %v700 = vpack.c.b16 %v693, %v692
  %v701 = vpack.c.b16 %v695, %v694
  %v702 = vpack.c.b16 %v697, %v696
  %703 = vrot.lane.b32.xlu0 %v284, 96
  %v704 = vpop.permute.xlu0 %703
  %705 = vrot.lane.b32.xlu0 %v285, 96
  %v706 = vpop.permute.xlu0 %705
  %707 = vrot.lane.b32.xlu0 %v286, 96
  %v708 = vpop.permute.xlu0 %707
  %709 = vrot.lane.b32.xlu0 %v287, 96
  %v710 = vpop.permute.xlu0 %709
  %711 = vrot.lane.b32.xlu0 %v288, 96
  %v712 = vpop.permute.xlu0 %711
  %713 = vrot.lane.b32.xlu0 %v289, 96
  %v714 = vpop.permute.xlu0 %713
  %715 = vrot.lane.b32.xlu0 %v290, 96
  %v716 = vpop.permute.xlu0 %715
  %717 = vrot.lane.b32.xlu0 %v291, 96
  %v718 = vpop.permute.xlu0 %717
  %719 = vrot.lane.b32.xlu0 %v292, 96
  %v720 = vpop.permute.xlu0 %719
  %721 = vrot.lane.b32.xlu0 %v293, 96
  %v722 = vpop.permute.xlu0 %721
  %723 = vrot.lane.b32.xlu0 %v294, 96
  %v724 = vpop.permute.xlu0 %723
  %725 = vrot.lane.b32.xlu0 %v295, 96
  %v726 = vpop.permute.xlu0 %725
  %727 = vrot.lane.b32.xlu0 %v296, 96
  %v728 = vpop.permute.xlu0 %727
  %729 = vrot.lane.b32.xlu0 %v297, 96
  %v730 = vpop.permute.xlu0 %729
  %731 = vrot.lane.b32.xlu0 %v298, 96
  %v732 = vpop.permute.xlu0 %731
  %733 = vrot.lane.b32.xlu0 %v299, 96
  %v734 = vpop.permute.xlu0 %733
  %735 = vrot.lane.b32.xlu0 %v300, 96
  %v736 = vpop.permute.xlu0 %735
  %737 = vrot.lane.b32.xlu0 %v301, 96
  %v738 = vpop.permute.xlu0 %737
  %739 = vrot.lane.b32.xlu0 %v302, 96
  %v740 = vpop.permute.xlu0 %739
  %741 = vrot.lane.b32.xlu0 %v307, 96
  %v742 = vpop.permute.xlu0 %741
  %743 = vrot.lane.b32.xlu0 %v378, 96
  %v744 = vpop.permute.xlu0 %743
  %745 = vrot.lane.b32.xlu0 %v465, 96
  %v746 = vpop.permute.xlu0 %745
  %747 = vrot.lane.b32.xlu0 %v466, 96
  %v748 = vpop.permute.xlu0 %747
  %749 = vrot.lane.b32.xlu0 %v467, 96
  %v750 = vpop.permute.xlu0 %749
  %751 = vrot.lane.b32.xlu0 %v468, 96
  %v752 = vpop.permute.xlu0 %751
  %753 = vrot.lane.b32.xlu0 %v469, 96
  %v754 = vpop.permute.xlu0 %753
  %755 = vrot.lane.b32.xlu0 %v540, 96
  %v756 = vpop.permute.xlu0 %755
  %757 = vrot.lane.b32.xlu0 %v611, 96
  %v758 = vpop.permute.xlu0 %757
  %759 = vrot.lane.b32.xlu0 %v698, 96
  %v760 = vpop.permute.xlu0 %759
  %761 = vrot.lane.b32.xlu0 %v699, 96
  %v762 = vpop.permute.xlu0 %761
  %763 = vrot.lane.b32.xlu0 %v700, 96
  %v764 = vpop.permute.xlu0 %763
  %765 = vrot.lane.b32.xlu0 %v701, 96
  %v766 = vpop.permute.xlu0 %765
  %767 = vrot.lane.b32.xlu0 %v702, 96
  %v768 = vpop.permute.xlu0 %767
  %v771 = vunpack.c.l.b16 %v134
  %v772 = vunpack.c.l.b16 %v135
  %v773 = vpack.c.b16 %v772, %v771
  %774 = vrot.lane.b32.xlu0 %v285, 112
  %v775 = vpop.permute.xlu0 %774
  %776 = vrot.lane.b32.xlu0 %v286, 112
  %v777 = vpop.permute.xlu0 %776
  %778 = vrot.lane.b32.xlu0 %v287, 112
  %v779 = vpop.permute.xlu0 %778
  %780 = vrot.lane.b32.xlu0 %v288, 112
  %v781 = vpop.permute.xlu0 %780
  %782 = vrot.lane.b32.xlu0 %v289, 112
  %v783 = vpop.permute.xlu0 %782
  %784 = vrot.lane.b32.xlu0 %v290, 112
  %v785 = vpop.permute.xlu0 %784
  %786 = vrot.lane.b32.xlu0 %v291, 112
  %v787 = vpop.permute.xlu0 %786
  %788 = vrot.lane.b32.xlu0 %v292, 112
  %v789 = vpop.permute.xlu0 %788
  %790 = vrot.lane.b32.xlu0 %v293, 112
  %v791 = vpop.permute.xlu0 %790
  %792 = vrot.lane.b32.xlu0 %v294, 112
  %v793 = vpop.permute.xlu0 %792
  %794 = vrot.lane.b32.xlu0 %v295, 112
  %v795 = vpop.permute.xlu0 %794
  %796 = vrot.lane.b32.xlu0 %v296, 112
  %v797 = vpop.permute.xlu0 %796
  %798 = vrot.lane.b32.xlu0 %v297, 112
  %v799 = vpop.permute.xlu0 %798
  %800 = vrot.lane.b32.xlu0 %v298, 112
  %v801 = vpop.permute.xlu0 %800
  %802 = vrot.lane.b32.xlu0 %v299, 112
  %v803 = vpop.permute.xlu0 %802
  %804 = vrot.lane.b32.xlu0 %v300, 112
  %v805 = vpop.permute.xlu0 %804
  %806 = vrot.lane.b32.xlu0 %v301, 112
  %v807 = vpop.permute.xlu0 %806
  %808 = vrot.lane.b32.xlu0 %v302, 112
  %v809 = vpop.permute.xlu0 %808
  %810 = vrot.lane.b32.xlu0 %v307, 112
  %v811 = vpop.permute.xlu0 %810
  %812 = vrot.lane.b32.xlu0 %v378, 112
  %v813 = vpop.permute.xlu0 %812
  %814 = vrot.lane.b32.xlu0 %v465, 112
  %v815 = vpop.permute.xlu0 %814
  %816 = vrot.lane.b32.xlu0 %v466, 112
  %v817 = vpop.permute.xlu0 %816
  %818 = vrot.lane.b32.xlu0 %v467, 112
  %v819 = vpop.permute.xlu0 %818
  %820 = vrot.lane.b32.xlu0 %v468, 112
  %v821 = vpop.permute.xlu0 %820
  %822 = vrot.lane.b32.xlu0 %v469, 112
  %v823 = vpop.permute.xlu0 %822
  %824 = vrot.lane.b32.xlu0 %v540, 112
  %v825 = vpop.permute.xlu0 %824
  %826 = vrot.lane.b32.xlu0 %v611, 112
  %v827 = vpop.permute.xlu0 %826
  %828 = vrot.lane.b32.xlu0 %v698, 112
  %v829 = vpop.permute.xlu0 %828
  %830 = vrot.lane.b32.xlu0 %v699, 112
  %v831 = vpop.permute.xlu0 %830
  %832 = vrot.lane.b32.xlu0 %v700, 112
  %v833 = vpop.permute.xlu0 %832
  %834 = vrot.lane.b32.xlu0 %v701, 112
  %v835 = vpop.permute.xlu0 %834
  %836 = vrot.lane.b32.xlu0 %v702, 112
  %v837 = vpop.permute.xlu0 %836
  %838 = vrot.lane.b32.xlu0 %v773, 112
  %v839 = vpop.permute.xlu0 %838
  %v842 = vunpack.c.l.b16 %v136
  %v843 = vunpack.c.l.b16 %v137
  %v844 = vpack.c.b16 %v843, %v842
  %vm845 = vcmask 130048
  %v848 = vsel %vm845, %v270, %v309
  %v851 = vsel %vm845, %v271, %v311
  %v854 = vsel %vm845, %v272, %v313
  %v857 = vsel %vm845, %v273, %v315
  %v860 = vsel %vm845, %v274, %v317
  %v863 = vsel %vm845, %v275, %v319
  %v866 = vsel %vm845, %v276, %v321
  %v869 = vsel %vm845, %v277, %v323
  %v872 = vsel %vm845, %v278, %v325
  %v875 = vsel %vm845, %v279, %v327
  %v878 = vsel %vm845, %v280, %v329
  %v881 = vsel %vm845, %v281, %v331
  %v884 = vsel %vm845, %v282, %v333
  %v887 = vsel %vm845, %v283, %v335
  %v890 = vsel %vm845, %v284, %v337
  %v893 = vsel %vm845, %v285, %v339
  %v896 = vsel %vm845, %v286, %v341
  %v899 = vsel %vm845, %v287, %v343
  %v902 = vsel %vm845, %v288, %v345
  %v905 = vsel %vm845, %v289, %v347
  %v908 = vsel %vm845, %v290, %v349
  %v911 = vsel %vm845, %v291, %v351
  %v914 = vsel %vm845, %v292, %v353
  %v917 = vsel %vm845, %v293, %v355
  %v920 = vsel %vm845, %v294, %v357
  %v923 = vsel %vm845, %v295, %v359
  %v926 = vsel %vm845, %v296, %v361
  %v929 = vsel %vm845, %v297, %v363
  %v932 = vsel %vm845, %v298, %v365
  %v935 = vsel %vm845, %v299, %v367
  %v938 = vsel %vm845, %v300, %v369
  %v941 = vsel %vm845, %v301, %v371
  %v944 = vsel %vm845, %v302, %v373
  %vm945 = vcmask 261120
  %v947 = vsel %vm945, %v848, %v380
  %v949 = vsel %vm945, %v851, %v382
  %v951 = vsel %vm945, %v854, %v384
  %v953 = vsel %vm945, %v857, %v386
  %v955 = vsel %vm945, %v860, %v388
  %v957 = vsel %vm945, %v863, %v390
  %v959 = vsel %vm945, %v866, %v392
  %v961 = vsel %vm945, %v869, %v394
  %v963 = vsel %vm945, %v872, %v396
  %v965 = vsel %vm945, %v875, %v398
  %v967 = vsel %vm945, %v878, %v400
  %v969 = vsel %vm945, %v881, %v402
  %v971 = vsel %vm945, %v884, %v404
  %v973 = vsel %vm945, %v887, %v406
  %v975 = vsel %vm945, %v890, %v408
  %v977 = vsel %vm945, %v893, %v410
  %v979 = vsel %vm945, %v896, %v412
  %v981 = vsel %vm945, %v899, %v414
  %v983 = vsel %vm945, %v902, %v416
  %v985 = vsel %vm945, %v905, %v418
  %v987 = vsel %vm945, %v908, %v420
  %v989 = vsel %vm945, %v911, %v422
  %v991 = vsel %vm945, %v914, %v424
  %v993 = vsel %vm945, %v917, %v426
  %v995 = vsel %vm945, %v920, %v428
  %v997 = vsel %vm945, %v923, %v430
  %v999 = vsel %vm945, %v926, %v432
  %v1001 = vsel %vm945, %v929, %v434
  %v1003 = vsel %vm945, %v932, %v436
  %v1005 = vsel %vm945, %v935, %v438
  %v1007 = vsel %vm945, %v938, %v440
  %v1009 = vsel %vm945, %v941, %v442
  %v1011 = vsel %vm945, %v944, %v444
  %vm1012 = vcmask 392192
  %v1014 = vsel %vm1012, %v947, %v471
  %v1016 = vsel %vm1012, %v949, %v473
  %v1018 = vsel %vm1012, %v951, %v475
  %v1020 = vsel %vm1012, %v953, %v477
  %v1022 = vsel %vm1012, %v955, %v479
  %v1024 = vsel %vm1012, %v957, %v481
  %v1026 = vsel %vm1012, %v959, %v483
  %v1028 = vsel %vm1012, %v961, %v485
  %v1030 = vsel %vm1012, %v963, %v487
  %v1032 = vsel %vm1012, %v965, %v489
  %v1034 = vsel %vm1012, %v967, %v491
  %v1036 = vsel %vm1012, %v969, %v493
  %v1038 = vsel %vm1012, %v971, %v495
  %v1040 = vsel %vm1012, %v973, %v497
  %v1042 = vsel %vm1012, %v975, %v499
  %v1044 = vsel %vm1012, %v977, %v501
  %v1046 = vsel %vm1012, %v979, %v503
  %v1048 = vsel %vm1012, %v981, %v505
  %v1050 = vsel %vm1012, %v983, %v507
  %v1052 = vsel %vm1012, %v985, %v509
  %v1054 = vsel %vm1012, %v987, %v511
  %v1056 = vsel %vm1012, %v989, %v513
  %v1058 = vsel %vm1012, %v991, %v515
  %v1060 = vsel %vm1012, %v993, %v517
  %v1062 = vsel %vm1012, %v995, %v519
  %v1064 = vsel %vm1012, %v997, %v521
  %v1066 = vsel %vm1012, %v999, %v523
  %v1068 = vsel %vm1012, %v1001, %v525
  %v1070 = vsel %vm1012, %v1003, %v527
  %v1072 = vsel %vm1012, %v1005, %v529
  %v1074 = vsel %vm1012, %v1007, %v531
  %v1076 = vsel %vm1012, %v1009, %v533
  %v1078 = vsel %vm1012, %v1011, %v535
  %vm1079 = vcmask 523264
  %v1081 = vsel %vm1079, %v1014, %v542
  %v1083 = vsel %vm1079, %v1016, %v544
  %v1085 = vsel %vm1079, %v1018, %v546
  %v1087 = vsel %vm1079, %v1020, %v548
  %v1089 = vsel %vm1079, %v1022, %v550
  %v1091 = vsel %vm1079, %v1024, %v552
  %v1093 = vsel %vm1079, %v1026, %v554
  %v1095 = vsel %vm1079, %v1028, %v556
  %v1097 = vsel %vm1079, %v1030, %v558
  %v1099 = vsel %vm1079, %v1032, %v560
  %v1101 = vsel %vm1079, %v1034, %v562
  %v1103 = vsel %vm1079, %v1036, %v564
  %v1105 = vsel %vm1079, %v1038, %v566
  %v1107 = vsel %vm1079, %v1040, %v568
  %v1109 = vsel %vm1079, %v1042, %v570
  %v1111 = vsel %vm1079, %v1044, %v572
  %v1113 = vsel %vm1079, %v1046, %v574
  %v1115 = vsel %vm1079, %v1048, %v576
  %v1117 = vsel %vm1079, %v1050, %v578
  %v1119 = vsel %vm1079, %v1052, %v580
  %v1121 = vsel %vm1079, %v1054, %v582
  %v1123 = vsel %vm1079, %v1056, %v584
  %v1125 = vsel %vm1079, %v1058, %v586
  %v1127 = vsel %vm1079, %v1060, %v588
  %v1129 = vsel %vm1079, %v1062, %v590
  %v1131 = vsel %vm1079, %v1064, %v592
  %v1133 = vsel %vm1079, %v1066, %v594
  %v1135 = vsel %vm1079, %v1068, %v596
  %v1137 = vsel %vm1079, %v1070, %v598
  %v1139 = vsel %vm1079, %v1072, %v600
  %v1141 = vsel %vm1079, %v1074, %v602
  %v1143 = vsel %vm1079, %v1076, %v604
  %v1145 = vsel %vm1079, %v1078, %v606
  %vm1146 = vcmask 654336
  %v1148 = vsel %vm1146, %v1081, %v613
  %v1150 = vsel %vm1146, %v1083, %v615
  %v1152 = vsel %vm1146, %v1085, %v617
  %v1154 = vsel %vm1146, %v1087, %v619
  %v1156 = vsel %vm1146, %v1089, %v621
  %v1158 = vsel %vm1146, %v1091, %v623
  %v1160 = vsel %vm1146, %v1093, %v625
  %v1162 = vsel %vm1146, %v1095, %v627
  %v1164 = vsel %vm1146, %v1097, %v629
  %v1166 = vsel %vm1146, %v1099, %v631
  %v1168 = vsel %vm1146, %v1101, %v633
  %v1170 = vsel %vm1146, %v1103, %v635
  %v1172 = vsel %vm1146, %v1105, %v637
  %v1174 = vsel %vm1146, %v1107, %v639
  %v1176 = vsel %vm1146, %v1109, %v641
  %v1178 = vsel %vm1146, %v1111, %v643
  %v1180 = vsel %vm1146, %v1113, %v645
  %v1182 = vsel %vm1146, %v1115, %v647
  %v1184 = vsel %vm1146, %v1117, %v649
  %v1186 = vsel %vm1146, %v1119, %v651
  %v1188 = vsel %vm1146, %v1121, %v653
  %v1190 = vsel %vm1146, %v1123, %v655
  %v1192 = vsel %vm1146, %v1125, %v657
  %v1194 = vsel %vm1146, %v1127, %v659
  %v1196 = vsel %vm1146, %v1129, %v661
  %v1198 = vsel %vm1146, %v1131, %v663
  %v1200 = vsel %vm1146, %v1133, %v665
  %v1202 = vsel %vm1146, %v1135, %v667
  %v1204 = vsel %vm1146, %v1137, %v669
  %v1206 = vsel %vm1146, %v1139, %v671
  %v1208 = vsel %vm1146, %v1141, %v673
  %v1210 = vsel %vm1146, %v1143, %v675
  %v1212 = vsel %vm1146, %v1145, %v677
  %vm1213 = vcmask 785408
  %v1215 = vsel %vm1213, %v1148, %v704
  %v1217 = vsel %vm1213, %v1150, %v706
  %v1219 = vsel %vm1213, %v1152, %v708
  %v1221 = vsel %vm1213, %v1154, %v710
  %v1223 = vsel %vm1213, %v1156, %v712
  %v1225 = vsel %vm1213, %v1158, %v714
  %v1227 = vsel %vm1213, %v1160, %v716
  %v1229 = vsel %vm1213, %v1162, %v718
  %v1231 = vsel %vm1213, %v1164, %v720
  %v1233 = vsel %vm1213, %v1166, %v722
  %v1235 = vsel %vm1213, %v1168, %v724
  %v1237 = vsel %vm1213, %v1170, %v726
  %v1239 = vsel %vm1213, %v1172, %v728
  %v1241 = vsel %vm1213, %v1174, %v730
  %v1243 = vsel %vm1213, %v1176, %v732
  %v1245 = vsel %vm1213, %v1178, %v734
  %v1247 = vsel %vm1213, %v1180, %v736
  %v1249 = vsel %vm1213, %v1182, %v738
  %v1251 = vsel %vm1213, %v1184, %v740
  %v1253 = vsel %vm1213, %v1186, %v742
  %v1255 = vsel %vm1213, %v1188, %v744
  %v1257 = vsel %vm1213, %v1190, %v746
  %v1259 = vsel %vm1213, %v1192, %v748
  %v1261 = vsel %vm1213, %v1194, %v750
  %v1263 = vsel %vm1213, %v1196, %v752
  %v1265 = vsel %vm1213, %v1198, %v754
  %v1267 = vsel %vm1213, %v1200, %v756
  %v1269 = vsel %vm1213, %v1202, %v758
  %v1271 = vsel %vm1213, %v1204, %v760
  %v1273 = vsel %vm1213, %v1206, %v762
  %v1275 = vsel %vm1213, %v1208, %v764
  %v1277 = vsel %vm1213, %v1210, %v766
  %v1279 = vsel %vm1213, %v1212, %v768
  %vm1280 = vcmask 916480
  %v1282 = vsel %vm1280, %v1215, %v775
  %v1285 = vsel %vm1280, %v1217, %v777
  %v1288 = vsel %vm1280, %v1219, %v779
  %v1291 = vsel %vm1280, %v1221, %v781
  %v1294 = vsel %vm1280, %v1223, %v783
  %v1297 = vsel %vm1280, %v1225, %v785
  %v1300 = vsel %vm1280, %v1227, %v787
  %v1303 = vsel %vm1280, %v1229, %v789
  %v1306 = vsel %vm1280, %v1231, %v791
  %v1309 = vsel %vm1280, %v1233, %v793
  %v1312 = vsel %vm1280, %v1235, %v795
  %v1315 = vsel %vm1280, %v1237, %v797
  %v1318 = vsel %vm1280, %v1239, %v799
  %v1321 = vsel %vm1280, %v1241, %v801
  %v1324 = vsel %vm1280, %v1243, %v803
  %v1327 = vsel %vm1280, %v1245, %v805
  %v1330 = vsel %vm1280, %v1247, %v807
  %v1333 = vsel %vm1280, %v1249, %v809
  %v1336 = vsel %vm1280, %v1251, %v811
  %v1339 = vsel %vm1280, %v1253, %v813
  %v1342 = vsel %vm1280, %v1255, %v815
  %v1345 = vsel %vm1280, %v1257, %v817
  %v1348 = vsel %vm1280, %v1259, %v819
  %v1351 = vsel %vm1280, %v1261, %v821
  %v1354 = vsel %vm1280, %v1263, %v823
  %v1357 = vsel %vm1280, %v1265, %v825
  %v1360 = vsel %vm1280, %v1267, %v827
  %v1363 = vsel %vm1280, %v1269, %v829
  %v1366 = vsel %vm1280, %v1271, %v831
  %v1369 = vsel %vm1280, %v1273, %v833
  %v1372 = vsel %vm1280, %v1275, %v835
  %v1375 = vsel %vm1280, %v1277, %v837
  %v1378 = vsel %vm1280, %v1279, %v839
  %v1380 = vld [vmem:[%s1] sm:$0xf]
  %v1381 = vld [vmem:[%s1 + $0x4] sm:$0xf]
  %v1382 = vld [vmem:[%s1 + $0x8] sm:$0xf]
  %v1383 = vld [vmem:[%s1 + $0xc] sm:$0xf]
  %v1384 = vld [vmem:[%s1 + $0x10] sm:$0xf]
  %v1385 = vld [vmem:[%s1 + $0x14] sm:$0xf]
  %v1386 = vld [vmem:[%s1 + $0x18] sm:$0xf]
  %v1387 = vld [vmem:[%s1 + $0x1c] sm:$0xf]
  %v1388 = vld [vmem:[%s1 + $0x20] sm:$0xf]
  %v1389 = vld [vmem:[%s1 + $0x24] sm:$0xf]
  %v1390 = vld [vmem:[%s1 + $0x28] sm:$0xf]
  %v1391 = vld [vmem:[%s1 + $0x2c] sm:$0xf]
  %v1392 = vld [vmem:[%s1 + $0x30] sm:$0xf]
  %v1393 = vld [vmem:[%s1 + $0x34] sm:$0xf]
  %v1394 = vld [vmem:[%s1 + $0x38] sm:$0xf]
  %v1395 = vld [vmem:[%s1 + $0x3c] sm:$0xf]
  %v1396 = vld [vmem:[%s1 + $0x40] sm:$0xf]
  %v1397 = vld [vmem:[%s1 + $0x44] sm:$0xf]
  %v1399 = vlaneseq
  %v1400 = vshrl.u32 %v1399, 7
  %v1401 = vsub.s32 0, %v1400
  %v1402 = vrot.slane %v39, %v1401
  %v1422 = vunpack.c.l.b16 %v1380
  %v1423 = vunpack.c.l.b16 %v1381
  %v1424 = vunpack.c.l.b16 %v1382
  %v1425 = vunpack.c.l.b16 %v1383
  %v1426 = vunpack.c.l.b16 %v1384
  %v1427 = vunpack.c.l.b16 %v1385
  %v1428 = vunpack.c.l.b16 %v1386
  %v1429 = vunpack.c.l.b16 %v1387
  %v1430 = vunpack.c.l.b16 %v1388
  %v1431 = vunpack.c.l.b16 %v1389
  %v1432 = vunpack.c.l.b16 %v1390
  %v1433 = vunpack.c.l.b16 %v1391
  %v1434 = vunpack.c.l.b16 %v1392
  %v1435 = vunpack.c.l.b16 %v1393
  %v1436 = vunpack.c.l.b16 %v1394
  %v1437 = vunpack.c.l.b16 %v1395
  %v1438 = vunpack.c.l.b16 %v1396
  %v1439 = vunpack.c.l.b16 %v1397
  %v1440 = vpack.c.b16 %v1423, %v1422
  %v1441 = vpack.c.b16 %v1425, %v1424
  %v1442 = vpack.c.b16 %v1427, %v1426
  %v1443 = vpack.c.b16 %v1429, %v1428
  %v1444 = vpack.c.b16 %v1431, %v1430
  %v1445 = vpack.c.b16 %v1433, %v1432
  %v1446 = vpack.c.b16 %v1435, %v1434
  %v1447 = vpack.c.b16 %v1437, %v1436
  %v1448 = vpack.c.b16 %v1439, %v1438
  %v1458 = vsel %vm845, %v286, 0
  %v1460 = vsel %vm845, %v287, 0
  %v1462 = vsel %vm845, %v288, 0
  %v1464 = vsel %vm845, %v289, 0
  %v1466 = vsel %vm845, %v290, 0
  %v1468 = vsel %vm845, %v291, 0
  %v1470 = vsel %vm845, %v292, 0
  %v1472 = vsel %vm845, %v293, 0
  %v1474 = vsel %vm845, %v294, 0
  %v1476 = vsel %vm845, %v295, 0
  %v1478 = vsel %vm845, %v296, 0
  %v1480 = vsel %vm845, %v297, 0
  %v1482 = vsel %vm845, %v298, 0
  %v1484 = vsel %vm845, %v299, 0
  %v1486 = vsel %vm845, %v300, 0
  %v1488 = vsel %vm845, %v301, 0
  %v1490 = vsel %vm845, %v302, 0
  %v1493 = vsel %vm845, %v307, 0
  %v1496 = vsel %vm845, %v378, 0
  %v1499 = vsel %vm845, %v465, 0
  %v1502 = vsel %vm845, %v466, 0
  %v1505 = vsel %vm845, %v467, 0
  %v1508 = vsel %vm845, %v468, 0
  %v1511 = vsel %vm845, %v469, 0
  %v1514 = vsel %vm845, %v540, 0
  %v1517 = vsel %vm845, %v611, 0
  %v1520 = vsel %vm845, %v698, 0
  %v1523 = vsel %vm845, %v699, 0
  %v1526 = vsel %vm845, %v700, 0
  %v1529 = vsel %vm845, %v701, 0
  %v1532 = vsel %vm845, %v702, 0
  %v1535 = vsel %vm845, %v773, 0
  %v1538 = vsel %vm845, %v844, 0
  %1540 = vmatprep.subr.bf16.mxu0 0
  %1541 = vmatpush1.bf16.msra.mxu0 %v1447
  %1542 = vmatprep.subr.bf16.mxu0 0
  %1543 = vmatpush1.bf16.msra.mxu0 %v1446
  %1544 = vmatprep.subr.bf16.mxu0 0
  %1545 = vmatpush1.bf16.msra.mxu0 %v1445
  %1546 = vmatprep.subr.bf16.mxu0 0
  %1547 = vmatpush1.bf16.msra.mxu0 %v1444
  %1548 = vmatprep.subr.bf16.mxu0 0
  %1549 = vmatpush1.bf16.msra.mxu0 %v1443
  %1550 = vmatprep.subr.bf16.mxu0 0
  %1551 = vmatpush1.bf16.msra.mxu0 %v1442
  %1552 = vmatprep.subr.bf16.mxu0 0
  %1553 = vmatpush1.bf16.msra.mxu0 %v1441
  %1554 = vmatprep.subr.bf16.mxu0 0
  %1555 = vmatpush1.bf16.msra.mxu0 %v1440
  %1556 = vmatprep.subr.bf16.mxu0 0
  %1557 = vmatpush2.bf16.msra.mxu0 0
  %1558 = vmatprep.subr.bf16.mxu0 0
  %1559 = vmatpush2.bf16.msra.mxu0 0
  %1560 = vmatprep.subr.bf16.mxu0 0
  %1561 = vmatpush2.bf16.msra.mxu0 0
  %1562 = vmatprep.subr.bf16.mxu0 0
  %1563 = vmatpush2.bf16.msra.mxu0 0
  %1564 = vmatprep.subr.bf16.mxu0 0
  %1565 = vmatpush2.bf16.msra.mxu0 0
  %1566 = vmatprep.subr.bf16.mxu0 0
  %1567 = vmatpush2.bf16.msra.mxu0 0
  %1568 = vmatprep.subr.bf16.mxu0 0
  %1569 = vmatpush2.bf16.msra.mxu0 0
  %1570 = vmatprep.subr.bf16.mxu0 0
  %1571 = vmatpush2.bf16.msra.mxu0 %v1448
  %1572 = vmatprep.mubr.bf16.mxu0 %v1458
  %1573 = vmatmul.mubr.bf16.gmra.mxu0 %v1282
  %v1574 = vpop.f32.mrf.mxu0
  %v1575 = vadd.f32 %v1402, %v1574
  %v1576 = vpop.f32.mrf.mxu0
  %v1577 = vpop.f32.mrf.mxu0
  %v1578 = vadd.f32 %v1402, %v1577
  %v1579 = vpop.f32.mrf.mxu0
  %1580 = vmatprep.mubr.bf16.mxu0 %v1460
  %1581 = vmatmul.mubr.bf16.gmra.mxu0 %v1285
  %v1582 = vpop.f32.mrf.mxu0
  %v1583 = vadd.f32 %v1402, %v1582
  %v1584 = vpop.f32.mrf.mxu0
  %v1585 = vpop.f32.mrf.mxu0
  %v1586 = vadd.f32 %v1402, %v1585
  %v1587 = vpop.f32.mrf.mxu0
  %1588 = vmatprep.mubr.bf16.mxu0 %v1462
  %1589 = vmatmul.mubr.bf16.gmra.mxu0 %v1288
  %v1590 = vpop.f32.mrf.mxu0
  %v1591 = vadd.f32 %v1402, %v1590
  %v1592 = vpop.f32.mrf.mxu0
  %v1593 = vpop.f32.mrf.mxu0
  %v1594 = vadd.f32 %v1402, %v1593
  %v1595 = vpop.f32.mrf.mxu0
  %1596 = vmatprep.mubr.bf16.mxu0 %v1464
  %1597 = vmatmul.mubr.bf16.gmra.mxu0 %v1291
  %v1598 = vpop.f32.mrf.mxu0
  %v1599 = vadd.f32 %v1402, %v1598
  %v1600 = vpop.f32.mrf.mxu0
  %v1601 = vpop.f32.mrf.mxu0
  %v1602 = vadd.f32 %v1402, %v1601
  %v1603 = vpop.f32.mrf.mxu0
  %1604 = vmatprep.mubr.bf16.mxu0 %v1466
  %1605 = vmatmul.mubr.bf16.gmra.mxu0 %v1294
  %v1606 = vpop.f32.mrf.mxu0
  %v1607 = vadd.f32 %v1402, %v1606
  %v1608 = vpop.f32.mrf.mxu0
  %v1609 = vpop.f32.mrf.mxu0
  %v1610 = vadd.f32 %v1402, %v1609
  %v1611 = vpop.f32.mrf.mxu0
  %1612 = vmatprep.mubr.bf16.mxu0 %v1468
  %1613 = vmatmul.mubr.bf16.gmra.mxu0 %v1297
  %v1614 = vpop.f32.mrf.mxu0
  %v1615 = vadd.f32 %v1402, %v1614
  %v1616 = vpop.f32.mrf.mxu0
  %v1617 = vpop.f32.mrf.mxu0
  %v1618 = vadd.f32 %v1402, %v1617
  %v1619 = vpop.f32.mrf.mxu0
  %1620 = vmatprep.mubr.bf16.mxu0 %v1470
  %1621 = vmatmul.mubr.bf16.gmra.mxu0 %v1300
  %v1622 = vpop.f32.mrf.mxu0
  %v1623 = vadd.f32 %v1402, %v1622
  %v1624 = vpop.f32.mrf.mxu0
  %v1625 = vpop.f32.mrf.mxu0
  %v1626 = vadd.f32 %v1402, %v1625
  %v1627 = vpop.f32.mrf.mxu0
  %1628 = vmatprep.mubr.bf16.mxu0 %v1472
  %1629 = vmatmul.mubr.bf16.gmra.mxu0 %v1303
  %v1630 = vpop.f32.mrf.mxu0
  %v1631 = vadd.f32 %v1402, %v1630
  %v1632 = vpop.f32.mrf.mxu0
  %v1633 = vpop.f32.mrf.mxu0
  %v1634 = vadd.f32 %v1402, %v1633
  %v1635 = vpop.f32.mrf.mxu0
  %1636 = vmatprep.mubr.bf16.mxu0 %v1474
  %1637 = vmatmul.mubr.bf16.gmra.mxu0 %v1306
  %v1638 = vpop.f32.mrf.mxu0
  %v1639 = vadd.f32 %v1402, %v1638
  %v1640 = vpop.f32.mrf.mxu0
  %v1641 = vpop.f32.mrf.mxu0
  %v1642 = vadd.f32 %v1402, %v1641
  %v1643 = vpop.f32.mrf.mxu0
  %1644 = vmatprep.mubr.bf16.mxu0 %v1476
  %1645 = vmatmul.mubr.bf16.gmra.mxu0 %v1309
  %v1646 = vpop.f32.mrf.mxu0
  %v1647 = vadd.f32 %v1402, %v1646
  %v1648 = vpop.f32.mrf.mxu0
  %v1649 = vpop.f32.mrf.mxu0
  %v1650 = vadd.f32 %v1402, %v1649
  %v1651 = vpop.f32.mrf.mxu0
  %1652 = vmatprep.mubr.bf16.mxu0 %v1478
  %1653 = vmatmul.mubr.bf16.gmra.mxu0 %v1312
  %v1654 = vpop.f32.mrf.mxu0
  %v1655 = vadd.f32 %v1402, %v1654
  %v1656 = vpop.f32.mrf.mxu0
  %v1657 = vpop.f32.mrf.mxu0
  %v1658 = vadd.f32 %v1402, %v1657
  %v1659 = vpop.f32.mrf.mxu0
  %1660 = vmatprep.mubr.bf16.mxu0 %v1480
  %1661 = vmatmul.mubr.bf16.gmra.mxu0 %v1315
  %v1662 = vpop.f32.mrf.mxu0
  %v1663 = vadd.f32 %v1402, %v1662
  %v1664 = vpop.f32.mrf.mxu0
  %v1665 = vpop.f32.mrf.mxu0
  %v1666 = vadd.f32 %v1402, %v1665
  %v1667 = vpop.f32.mrf.mxu0
  %1668 = vmatprep.mubr.bf16.mxu0 %v1482
  %1669 = vmatmul.mubr.bf16.gmra.mxu0 %v1318
  %v1670 = vpop.f32.mrf.mxu0
  %v1671 = vadd.f32 %v1402, %v1670
  %v1672 = vpop.f32.mrf.mxu0
  %v1673 = vpop.f32.mrf.mxu0
  %v1674 = vadd.f32 %v1402, %v1673
  %v1675 = vpop.f32.mrf.mxu0
  %1676 = vmatprep.mubr.bf16.mxu0 %v1484
  %1677 = vmatmul.mubr.bf16.gmra.mxu0 %v1321
  %v1678 = vpop.f32.mrf.mxu0
  %v1679 = vadd.f32 %v1402, %v1678
  %v1680 = vpop.f32.mrf.mxu0
  %v1681 = vpop.f32.mrf.mxu0
  %v1682 = vadd.f32 %v1402, %v1681
  %v1683 = vpop.f32.mrf.mxu0
  %1684 = vmatprep.mubr.bf16.mxu0 %v1486
  %1685 = vmatmul.mubr.bf16.gmra.mxu0 %v1324
  %v1686 = vpop.f32.mrf.mxu0
  %v1687 = vadd.f32 %v1402, %v1686
  %v1688 = vpop.f32.mrf.mxu0
  %v1689 = vpop.f32.mrf.mxu0
  %v1690 = vadd.f32 %v1402, %v1689
  %v1691 = vpop.f32.mrf.mxu0
  %1692 = vmatprep.mubr.bf16.mxu0 %v1488
  %1693 = vmatmul.mubr.bf16.gmra.mxu0 %v1327
  %v1694 = vpop.f32.mrf.mxu0
  %v1695 = vadd.f32 %v1402, %v1694
  %v1696 = vpop.f32.mrf.mxu0
  %v1697 = vpop.f32.mrf.mxu0
  %v1698 = vadd.f32 %v1402, %v1697
  %v1699 = vpop.f32.mrf.mxu0
  %1700 = vmatprep.mubr.bf16.mxu0 %v1490
  %1701 = vmatmul.mubr.bf16.gmra.mxu0 %v1330
  %v1702 = vpop.f32.mrf.mxu0
  %v1703 = vadd.f32 %v1402, %v1702
  %v1704 = vpop.f32.mrf.mxu0
  %v1705 = vpop.f32.mrf.mxu0
  %v1706 = vadd.f32 %v1402, %v1705
  %v1707 = vpop.f32.mrf.mxu0
  %1708 = vmatprep.mubr.bf16.mxu0 %v1493
  %1709 = vmatmul.mubr.bf16.gmra.mxu0 %v1333
  %v1710 = vpop.f32.mrf.mxu0
  %v1711 = vadd.f32 %v1402, %v1710
  %v1712 = vpop.f32.mrf.mxu0
  %v1713 = vpop.f32.mrf.mxu0
  %v1714 = vadd.f32 %v1402, %v1713
  %v1715 = vpop.f32.mrf.mxu0
  %1716 = vmatprep.mubr.bf16.mxu0 %v1496
  %1717 = vmatmul.mubr.bf16.gmra.mxu0 %v1336
  %v1718 = vpop.f32.mrf.mxu0
  %v1719 = vadd.f32 %v1402, %v1718
  %v1720 = vpop.f32.mrf.mxu0
  %v1721 = vpop.f32.mrf.mxu0
  %v1722 = vadd.f32 %v1402, %v1721
  %v1723 = vpop.f32.mrf.mxu0
  %1724 = vmatprep.mubr.bf16.mxu0 %v1499
  %1725 = vmatmul.mubr.bf16.gmra.mxu0 %v1339
  %v1726 = vpop.f32.mrf.mxu0
  %v1727 = vadd.f32 %v1402, %v1726
  %v1728 = vpop.f32.mrf.mxu0
  %v1729 = vpop.f32.mrf.mxu0
  %v1730 = vadd.f32 %v1402, %v1729
  %v1731 = vpop.f32.mrf.mxu0
  %1732 = vmatprep.mubr.bf16.mxu0 %v1502
  %1733 = vmatmul.mubr.bf16.gmra.mxu0 %v1342
  %v1734 = vpop.f32.mrf.mxu0
  %v1735 = vadd.f32 %v1402, %v1734
  %v1736 = vpop.f32.mrf.mxu0
  %v1737 = vpop.f32.mrf.mxu0
  %v1738 = vadd.f32 %v1402, %v1737
  %v1739 = vpop.f32.mrf.mxu0
  %1740 = vmatprep.mubr.bf16.mxu0 %v1505
  %1741 = vmatmul.mubr.bf16.gmra.mxu0 %v1345
  %v1742 = vpop.f32.mrf.mxu0
  %v1743 = vadd.f32 %v1402, %v1742
  %v1744 = vpop.f32.mrf.mxu0
  %v1745 = vpop.f32.mrf.mxu0
  %v1746 = vadd.f32 %v1402, %v1745
  %v1747 = vpop.f32.mrf.mxu0
  %1748 = vmatprep.mubr.bf16.mxu0 %v1508
  %1749 = vmatmul.mubr.bf16.gmra.mxu0 %v1348
  %v1750 = vpop.f32.mrf.mxu0
  %v1751 = vadd.f32 %v1402, %v1750
  %v1752 = vpop.f32.mrf.mxu0
  %v1753 = vpop.f32.mrf.mxu0
  %v1754 = vadd.f32 %v1402, %v1753
  %v1755 = vpop.f32.mrf.mxu0
  %1756 = vmatprep.mubr.bf16.mxu0 %v1511
  %1757 = vmatmul.mubr.bf16.gmra.mxu0 %v1351
  %v1758 = vpop.f32.mrf.mxu0
  %v1759 = vadd.f32 %v1402, %v1758
  %v1760 = vpop.f32.mrf.mxu0
  %v1761 = vpop.f32.mrf.mxu0
  %v1762 = vadd.f32 %v1402, %v1761
  %v1763 = vpop.f32.mrf.mxu0
  %1764 = vmatprep.mubr.bf16.mxu0 %v1514
  %1765 = vmatmul.mubr.bf16.gmra.mxu0 %v1354
  %v1766 = vpop.f32.mrf.mxu0
  %v1767 = vadd.f32 %v1402, %v1766
  %v1768 = vpop.f32.mrf.mxu0
  %v1769 = vpop.f32.mrf.mxu0
  %v1770 = vadd.f32 %v1402, %v1769
  %v1771 = vpop.f32.mrf.mxu0
  %1772 = vmatprep.mubr.bf16.mxu0 %v1517
  %1773 = vmatmul.mubr.bf16.gmra.mxu0 %v1357
  %v1774 = vpop.f32.mrf.mxu0
  %v1775 = vadd.f32 %v1402, %v1774
  %v1776 = vpop.f32.mrf.mxu0
  %v1777 = vpop.f32.mrf.mxu0
  %v1778 = vadd.f32 %v1402, %v1777
  %v1779 = vpop.f32.mrf.mxu0
  %1780 = vmatprep.mubr.bf16.mxu0 %v1520
  %1781 = vmatmul.mubr.bf16.gmra.mxu0 %v1360
  %v1782 = vpop.f32.mrf.mxu0
  %v1783 = vadd.f32 %v1402, %v1782
  %v1784 = vpop.f32.mrf.mxu0
  %v1785 = vpop.f32.mrf.mxu0
  %v1786 = vadd.f32 %v1402, %v1785
  %v1787 = vpop.f32.mrf.mxu0
  %1788 = vmatprep.mubr.bf16.mxu0 %v1523
  %1789 = vmatmul.mubr.bf16.gmra.mxu0 %v1363
  %v1790 = vpop.f32.mrf.mxu0
  %v1791 = vadd.f32 %v1402, %v1790
  %v1792 = vpop.f32.mrf.mxu0
  %v1793 = vpop.f32.mrf.mxu0
  %v1794 = vadd.f32 %v1402, %v1793
  %v1795 = vpop.f32.mrf.mxu0
  %1796 = vmatprep.mubr.bf16.mxu0 %v1526
  %1797 = vmatmul.mubr.bf16.gmra.mxu0 %v1366
  %v1798 = vpop.f32.mrf.mxu0
  %v1799 = vadd.f32 %v1402, %v1798
  %v1800 = vpop.f32.mrf.mxu0
  %v1801 = vpop.f32.mrf.mxu0
  %v1802 = vadd.f32 %v1402, %v1801
  %v1803 = vpop.f32.mrf.mxu0
  %1804 = vmatprep.mubr.bf16.mxu0 %v1529
  %1805 = vmatmul.mubr.bf16.gmra.mxu0 %v1369
  %v1806 = vpop.f32.mrf.mxu0
  %v1807 = vadd.f32 %v1402, %v1806
  %v1808 = vpop.f32.mrf.mxu0
  %v1809 = vpop.f32.mrf.mxu0
  %v1810 = vadd.f32 %v1402, %v1809
  %v1811 = vpop.f32.mrf.mxu0
  %1812 = vmatprep.mubr.bf16.mxu0 %v1532
  %1813 = vmatmul.mubr.bf16.gmra.mxu0 %v1372
  %v1814 = vpop.f32.mrf.mxu0
  %v1815 = vadd.f32 %v1402, %v1814
  %v1816 = vpop.f32.mrf.mxu0
  %v1817 = vpop.f32.mrf.mxu0
  %v1818 = vadd.f32 %v1402, %v1817
  %v1819 = vpop.f32.mrf.mxu0
  %1820 = vmatprep.mubr.bf16.mxu0 %v1535
  %1821 = vmatmul.mubr.bf16.gmra.mxu0 %v1375
  %v1822 = vpop.f32.mrf.mxu0
  %v1823 = vadd.f32 %v1402, %v1822
  %v1824 = vpop.f32.mrf.mxu0
  %v1825 = vpop.f32.mrf.mxu0
  %v1826 = vadd.f32 %v1402, %v1825
  %v1827 = vpop.f32.mrf.mxu0
  %1828 = vmatprep.mubr.bf16.mxu0 %v1538
  %1829 = vmatmul.mubr.bf16.gmra.mxu0 %v1378
  %v1830 = vpop.f32.mrf.mxu0
  %v1831 = vadd.f32 %v1402, %v1830
  %v1832 = vpop.f32.mrf.mxu0
  %v1833 = vpop.f32.mrf.mxu0
  %v1834 = vadd.f32 %v1402, %v1833
  %v1835 = vpop.f32.mrf.mxu0
  %1836 = vdwg.mxu0
  %v1837 = vmax.f32 %v1575, 0.0
  %v1838 = vmax.f32 %v1578, 0.0
  %v1839 = vmax.f32 %v1583, 0.0
  %v1840 = vmax.f32 %v1586, 0.0
  %v1841 = vmax.f32 %v1591, 0.0
  %v1842 = vmax.f32 %v1594, 0.0
  %v1843 = vmax.f32 %v1599, 0.0
  %v1844 = vmax.f32 %v1602, 0.0
  %v1845 = vmax.f32 %v1607, 0.0
  %v1846 = vmax.f32 %v1610, 0.0
  %v1847 = vmax.f32 %v1615, 0.0
  %v1848 = vmax.f32 %v1618, 0.0
  %v1849 = vmax.f32 %v1623, 0.0
  %v1850 = vmax.f32 %v1626, 0.0
  %v1851 = vmax.f32 %v1631, 0.0
  %v1852 = vmax.f32 %v1634, 0.0
  %v1853 = vmax.f32 %v1639, 0.0
  %v1854 = vmax.f32 %v1642, 0.0
  %v1855 = vmax.f32 %v1647, 0.0
  %v1856 = vmax.f32 %v1650, 0.0
  %v1857 = vmax.f32 %v1655, 0.0
  %v1858 = vmax.f32 %v1658, 0.0
  %v1859 = vmax.f32 %v1663, 0.0
  %v1860 = vmax.f32 %v1666, 0.0
  %v1861 = vmax.f32 %v1671, 0.0
  %v1862 = vmax.f32 %v1674, 0.0
  %v1863 = vmax.f32 %v1679, 0.0
  %v1864 = vmax.f32 %v1682, 0.0
  %v1865 = vmax.f32 %v1687, 0.0
  %v1866 = vmax.f32 %v1690, 0.0
  %v1867 = vmax.f32 %v1695, 0.0
  %v1868 = vmax.f32 %v1698, 0.0
  %v1869 = vmax.f32 %v1703, 0.0
  %v1870 = vmax.f32 %v1706, 0.0
  %v1871 = vmax.f32 %v1711, 0.0
  %v1872 = vmax.f32 %v1714, 0.0
  %v1873 = vmax.f32 %v1719, 0.0
  %v1874 = vmax.f32 %v1722, 0.0
  %v1875 = vmax.f32 %v1727, 0.0
  %v1876 = vmax.f32 %v1730, 0.0
  %v1877 = vmax.f32 %v1735, 0.0
  %v1878 = vmax.f32 %v1738, 0.0
  %v1879 = vmax.f32 %v1743, 0.0
  %v1880 = vmax.f32 %v1746, 0.0
  %v1881 = vmax.f32 %v1751, 0.0
  %v1882 = vmax.f32 %v1754, 0.0
  %v1883 = vmax.f32 %v1759, 0.0
  %v1884 = vmax.f32 %v1762, 0.0
  %v1885 = vmax.f32 %v1767, 0.0
  %v1886 = vmax.f32 %v1770, 0.0
  %v1887 = vmax.f32 %v1775, 0.0
  %v1888 = vmax.f32 %v1778, 0.0
  %v1889 = vmax.f32 %v1783, 0.0
  %v1890 = vmax.f32 %v1786, 0.0
  %v1891 = vmax.f32 %v1791, 0.0
  %v1892 = vmax.f32 %v1794, 0.0
  %v1893 = vmax.f32 %v1799, 0.0
  %v1894 = vmax.f32 %v1802, 0.0
  %v1895 = vmax.f32 %v1807, 0.0
  %v1896 = vmax.f32 %v1810, 0.0
  %v1897 = vmax.f32 %v1815, 0.0
  %v1898 = vmax.f32 %v1818, 0.0
  %v1899 = vmax.f32 %v1823, 0.0
  %v1900 = vmax.f32 %v1826, 0.0
  %v1901 = vmax.f32 %v1831, 0.0
  %v1902 = vmax.f32 %v1834, 0.0
  %v1903 = vpack.c.bf16 %v1838, %v1837
  %v1904 = vpack.c.bf16 %v1840, %v1839
  %v1905 = vpack.c.bf16 %v1842, %v1841
  %v1906 = vpack.c.bf16 %v1844, %v1843
  %v1907 = vpack.c.bf16 %v1846, %v1845
  %v1908 = vpack.c.bf16 %v1848, %v1847
  %v1909 = vpack.c.bf16 %v1850, %v1849
  %v1910 = vpack.c.bf16 %v1852, %v1851
  %v1911 = vpack.c.bf16 %v1854, %v1853
  %v1912 = vpack.c.bf16 %v1856, %v1855
  %v1913 = vpack.c.bf16 %v1858, %v1857
  %v1914 = vpack.c.bf16 %v1860, %v1859
  %v1915 = vpack.c.bf16 %v1862, %v1861
  %v1916 = vpack.c.bf16 %v1864, %v1863
  %v1917 = vpack.c.bf16 %v1866, %v1865
  %v1918 = vpack.c.bf16 %v1868, %v1867
  %v1919 = vpack.c.bf16 %v1870, %v1869
  %v1920 = vpack.c.bf16 %v1872, %v1871
  %v1921 = vpack.c.bf16 %v1874, %v1873
  %v1922 = vpack.c.bf16 %v1876, %v1875
  %v1923 = vpack.c.bf16 %v1878, %v1877
  %v1924 = vpack.c.bf16 %v1880, %v1879
  %v1925 = vpack.c.bf16 %v1882, %v1881
  %v1926 = vpack.c.bf16 %v1884, %v1883
  %v1927 = vpack.c.bf16 %v1886, %v1885
  %v1928 = vpack.c.bf16 %v1888, %v1887
  %v1929 = vpack.c.bf16 %v1890, %v1889
  %v1930 = vpack.c.bf16 %v1892, %v1891
  %v1931 = vpack.c.bf16 %v1894, %v1893
  %v1932 = vpack.c.bf16 %v1896, %v1895
  %v1933 = vpack.c.bf16 %v1898, %v1897
  %v1934 = vpack.c.bf16 %v1900, %v1899
  %v1935 = vpack.c.bf16 %v1902, %v1901
  %v1936 = vld [vmem:[%s4] sm:$0x1]
  %1954 = vrot.lane.b32.xlu0 %v1904, 32
  %v1955 = vpop.permute.xlu0 %1954
  %1956 = vrot.lane.b32.xlu0 %v1905, 32
  %v1957 = vpop.permute.xlu0 %1956
  %1958 = vrot.lane.b32.xlu0 %v1906, 32
  %v1959 = vpop.permute.xlu0 %1958
  %1960 = vrot.lane.b32.xlu0 %v1907, 32
  %v1961 = vpop.permute.xlu0 %1960
  %1962 = vrot.lane.b32.xlu0 %v1908, 32
  %v1963 = vpop.permute.xlu0 %1962
  %1964 = vrot.lane.b32.xlu0 %v1909, 32
  %v1965 = vpop.permute.xlu0 %1964
  %1966 = vrot.lane.b32.xlu0 %v1910, 32
  %v1967 = vpop.permute.xlu0 %1966
  %1968 = vrot.lane.b32.xlu0 %v1911, 32
  %v1969 = vpop.permute.xlu0 %1968
  %1970 = vrot.lane.b32.xlu0 %v1912, 32
  %v1971 = vpop.permute.xlu0 %1970
  %1972 = vrot.lane.b32.xlu0 %v1913, 32
  %v1973 = vpop.permute.xlu0 %1972
  %1974 = vrot.lane.b32.xlu0 %v1914, 32
  %v1975 = vpop.permute.xlu0 %1974
  %1976 = vrot.lane.b32.xlu0 %v1915, 32
  %v1977 = vpop.permute.xlu0 %1976
  %1978 = vrot.lane.b32.xlu0 %v1916, 32
  %v1979 = vpop.permute.xlu0 %1978
  %1980 = vrot.lane.b32.xlu0 %v1917, 32
  %v1981 = vpop.permute.xlu0 %1980
  %1982 = vrot.lane.b32.xlu0 %v1918, 32
  %v1983 = vpop.permute.xlu0 %1982
  %1984 = vrot.lane.b32.xlu0 %v1919, 32
  %v1985 = vpop.permute.xlu0 %1984
  %1986 = vrot.lane.b32.xlu0 %v1920, 32
  %v1987 = vpop.permute.xlu0 %1986
  %1989 = vrot.lane.b32.xlu0 %v1905, 64
  %v1990 = vpop.permute.xlu0 %1989
  %1991 = vrot.lane.b32.xlu0 %v1906, 64
  %v1992 = vpop.permute.xlu0 %1991
  %1993 = vrot.lane.b32.xlu0 %v1907, 64
  %v1994 = vpop.permute.xlu0 %1993
  %1995 = vrot.lane.b32.xlu0 %v1908, 64
  %v1996 = vpop.permute.xlu0 %1995
  %1997 = vrot.lane.b32.xlu0 %v1909, 64
  %v1998 = vpop.permute.xlu0 %1997
  %1999 = vrot.lane.b32.xlu0 %v1910, 64
  %v2000 = vpop.permute.xlu0 %1999
  %2001 = vrot.lane.b32.xlu0 %v1911, 64
  %v2002 = vpop.permute.xlu0 %2001
  %2003 = vrot.lane.b32.xlu0 %v1912, 64
  %v2004 = vpop.permute.xlu0 %2003
  %2005 = vrot.lane.b32.xlu0 %v1913, 64
  %v2006 = vpop.permute.xlu0 %2005
  %2007 = vrot.lane.b32.xlu0 %v1914, 64
  %v2008 = vpop.permute.xlu0 %2007
  %2009 = vrot.lane.b32.xlu0 %v1915, 64
  %v2010 = vpop.permute.xlu0 %2009
  %2011 = vrot.lane.b32.xlu0 %v1916, 64
  %v2012 = vpop.permute.xlu0 %2011
  %2013 = vrot.lane.b32.xlu0 %v1917, 64
  %v2014 = vpop.permute.xlu0 %2013
  %2015 = vrot.lane.b32.xlu0 %v1918, 64
  %v2016 = vpop.permute.xlu0 %2015
  %2017 = vrot.lane.b32.xlu0 %v1919, 64
  %v2018 = vpop.permute.xlu0 %2017
  %2019 = vrot.lane.b32.xlu0 %v1920, 64
  %v2020 = vpop.permute.xlu0 %2019
  %2021 = vrot.lane.b32.xlu0 %v1921, 64
  %v2022 = vpop.permute.xlu0 %2021
  %2028 = vrot.lane.b32.xlu0 %v1910, 96
  %v2029 = vpop.permute.xlu0 %2028
  %2030 = vrot.lane.b32.xlu0 %v1911, 96
  %v2031 = vpop.permute.xlu0 %2030
  %2032 = vrot.lane.b32.xlu0 %v1912, 96
  %v2033 = vpop.permute.xlu0 %2032
  %2034 = vrot.lane.b32.xlu0 %v1913, 96
  %v2035 = vpop.permute.xlu0 %2034
  %2036 = vrot.lane.b32.xlu0 %v1914, 96
  %v2037 = vpop.permute.xlu0 %2036
  %2038 = vrot.lane.b32.xlu0 %v1915, 96
  %v2039 = vpop.permute.xlu0 %2038
  %2040 = vrot.lane.b32.xlu0 %v1916, 96
  %v2041 = vpop.permute.xlu0 %2040
  %2042 = vrot.lane.b32.xlu0 %v1917, 96
  %v2043 = vpop.permute.xlu0 %2042
  %2044 = vrot.lane.b32.xlu0 %v1918, 96
  %v2045 = vpop.permute.xlu0 %2044
  %2046 = vrot.lane.b32.xlu0 %v1919, 96
  %v2047 = vpop.permute.xlu0 %2046
  %2048 = vrot.lane.b32.xlu0 %v1920, 96
  %v2049 = vpop.permute.xlu0 %2048
  %2050 = vrot.lane.b32.xlu0 %v1921, 96
  %v2051 = vpop.permute.xlu0 %2050
  %2052 = vrot.lane.b32.xlu0 %v1922, 96
  %v2053 = vpop.permute.xlu0 %2052
  %2054 = vrot.lane.b32.xlu0 %v1923, 96
  %v2055 = vpop.permute.xlu0 %2054
  %2056 = vrot.lane.b32.xlu0 %v1924, 96
  %v2057 = vpop.permute.xlu0 %2056
  %2058 = vrot.lane.b32.xlu0 %v1925, 96
  %v2059 = vpop.permute.xlu0 %2058
  %2060 = vrot.lane.b32.xlu0 %v1926, 96
  %v2061 = vpop.permute.xlu0 %2060
  %2064 = vrot.lane.b32.xlu0 %v1921, 32
  %v2065 = vpop.permute.xlu0 %2064
  %2066 = vrot.lane.b32.xlu0 %v1922, 32
  %v2067 = vpop.permute.xlu0 %2066
  %2068 = vrot.lane.b32.xlu0 %v1923, 32
  %v2069 = vpop.permute.xlu0 %2068
  %2070 = vrot.lane.b32.xlu0 %v1924, 32
  %v2071 = vpop.permute.xlu0 %2070
  %2072 = vrot.lane.b32.xlu0 %v1925, 32
  %v2073 = vpop.permute.xlu0 %2072
  %2074 = vrot.lane.b32.xlu0 %v1926, 32
  %v2075 = vpop.permute.xlu0 %2074
  %2076 = vrot.lane.b32.xlu0 %v1927, 32
  %v2077 = vpop.permute.xlu0 %2076
  %2078 = vrot.lane.b32.xlu0 %v1928, 32
  %v2079 = vpop.permute.xlu0 %2078
  %2085 = vrot.lane.b32.xlu0 %v1922, 64
  %v2086 = vpop.permute.xlu0 %2085
  %2087 = vrot.lane.b32.xlu0 %v1923, 64
  %v2088 = vpop.permute.xlu0 %2087
  %2089 = vrot.lane.b32.xlu0 %v1924, 64
  %v2090 = vpop.permute.xlu0 %2089
  %2091 = vrot.lane.b32.xlu0 %v1925, 64
  %v2092 = vpop.permute.xlu0 %2091
  %2093 = vrot.lane.b32.xlu0 %v1926, 64
  %v2094 = vpop.permute.xlu0 %2093
  %2095 = vrot.lane.b32.xlu0 %v1927, 64
  %v2096 = vpop.permute.xlu0 %2095
  %2097 = vrot.lane.b32.xlu0 %v1928, 64
  %v2098 = vpop.permute.xlu0 %2097
  %2099 = vrot.lane.b32.xlu0 %v1929, 64
  %v2100 = vpop.permute.xlu0 %2099
  %2101 = vrot.lane.b32.xlu0 %v1930, 64
  %v2102 = vpop.permute.xlu0 %2101
  %2103 = vrot.lane.b32.xlu0 %v1931, 64
  %v2104 = vpop.permute.xlu0 %2103
  %2105 = vrot.lane.b32.xlu0 %v1932, 64
  %v2106 = vpop.permute.xlu0 %2105
  %2107 = vrot.lane.b32.xlu0 %v1933, 64
  %v2108 = vpop.permute.xlu0 %2107
  %2110 = vrot.lane.b32.xlu0 %v1927, 96
  %v2111 = vpop.permute.xlu0 %2110
  %2112 = vrot.lane.b32.xlu0 %v1928, 96
  %v2113 = vpop.permute.xlu0 %2112
  %2114 = vrot.lane.b32.xlu0 %v1929, 96
  %v2115 = vpop.permute.xlu0 %2114
  %2116 = vrot.lane.b32.xlu0 %v1930, 96
  %v2117 = vpop.permute.xlu0 %2116
  %2118 = vrot.lane.b32.xlu0 %v1931, 96
  %v2119 = vpop.permute.xlu0 %2118
  %2120 = vrot.lane.b32.xlu0 %v1932, 96
  %v2121 = vpop.permute.xlu0 %2120
  %2122 = vrot.lane.b32.xlu0 %v1933, 96
  %v2123 = vpop.permute.xlu0 %2122
  %2124 = vrot.lane.b32.xlu0 %v1934, 96
  %v2125 = vpop.permute.xlu0 %2124
  %v2128 = vsel %vm945, %v1903, %v1955
  %v2131 = vsel %vm945, %v1904, %v1957
  %v2134 = vsel %vm945, %v1905, %v1959
  %v2137 = vsel %vm945, %v1906, %v1961
  %v2140 = vsel %vm945, %v1907, %v1963
  %v2143 = vsel %vm945, %v1908, %v1965
  %v2146 = vsel %vm945, %v1909, %v1967
  %v2149 = vsel %vm945, %v1910, %v1969
  %v2152 = vsel %vm945, %v1911, %v1971
  %v2155 = vsel %vm945, %v1912, %v1973
  %v2158 = vsel %vm945, %v1913, %v1975
  %v2161 = vsel %vm945, %v1914, %v1977
  %v2164 = vsel %vm945, %v1915, %v1979
  %v2167 = vsel %vm945, %v1916, %v1981
  %v2170 = vsel %vm945, %v1917, %v1983
  %v2173 = vsel %vm945, %v1918, %v1985
  %v2176 = vsel %vm945, %v1919, %v1987
  %v2178 = vsel %vm1079, %v2128, %v1990
  %v2180 = vsel %vm1079, %v2131, %v1992
  %v2182 = vsel %vm1079, %v2134, %v1994
  %v2184 = vsel %vm1079, %v2137, %v1996
  %v2186 = vsel %vm1079, %v2140, %v1998
  %v2188 = vsel %vm1079, %v2143, %v2000
  %v2190 = vsel %vm1079, %v2146, %v2002
  %v2192 = vsel %vm1079, %v2149, %v2004
  %v2194 = vsel %vm1079, %v2152, %v2006
  %v2196 = vsel %vm1079, %v2155, %v2008
  %v2198 = vsel %vm1079, %v2158, %v2010
  %v2200 = vsel %vm1079, %v2161, %v2012
  %v2202 = vsel %vm1079, %v2164, %v2014
  %v2204 = vsel %vm1079, %v2167, %v2016
  %v2206 = vsel %vm1079, %v2170, %v2018
  %v2208 = vsel %vm1079, %v2173, %v2020
  %v2210 = vsel %vm1079, %v2176, %v2022
  %v2212 = vsel %vm1213, %v2178, %v2029
  %v2215 = vsel %vm1213, %v2180, %v2031
  %v2218 = vsel %vm1213, %v2182, %v2033
  %v2221 = vsel %vm1213, %v2184, %v2035
  %v2224 = vsel %vm1213, %v2186, %v2037
  %v2227 = vsel %vm1213, %v2188, %v2039
  %v2230 = vsel %vm1213, %v2190, %v2041
  %v2233 = vsel %vm1213, %v2192, %v2043
  %v2236 = vsel %vm1213, %v2194, %v2045
  %v2239 = vsel %vm1213, %v2196, %v2047
  %v2242 = vsel %vm1213, %v2198, %v2049
  %v2245 = vsel %vm1213, %v2200, %v2051
  %v2248 = vsel %vm1213, %v2202, %v2053
  %v2251 = vsel %vm1213, %v2204, %v2055
  %v2254 = vsel %vm1213, %v2206, %v2057
  %v2257 = vsel %vm1213, %v2208, %v2059
  %v2260 = vsel %vm1213, %v2210, %v2061
  %v2264 = vsel %vm945, %v1920, %v2065
  %v2267 = vsel %vm945, %v1921, %v2067
  %v2270 = vsel %vm945, %v1922, %v2069
  %v2273 = vsel %vm945, %v1923, %v2071
  %v2276 = vsel %vm945, %v1924, %v2073
  %v2279 = vsel %vm945, %v1925, %v2075
  %v2282 = vsel %vm945, %v1926, %v2077
  %v2285 = vsel %vm945, %v1927, %v2079
  %v2286 = vsel %vm1079, %v2152, %v2014
  %v2287 = vsel %vm1079, %v2155, %v2016
  %v2288 = vsel %vm1079, %v2158, %v2018
  %v2289 = vsel %vm1079, %v2161, %v2020
  %v2290 = vsel %vm1079, %v2164, %v2022
  %v2292 = vsel %vm1079, %v2167, %v2086
  %v2294 = vsel %vm1079, %v2170, %v2088
  %v2296 = vsel %vm1079, %v2173, %v2090
  %v2298 = vsel %vm1079, %v2176, %v2092
  %v2300 = vsel %vm1079, %v2264, %v2094
  %v2302 = vsel %vm1079, %v2267, %v2096
  %v2304 = vsel %vm1079, %v2270, %v2098
  %v2306 = vsel %vm1079, %v2273, %v2100
  %v2308 = vsel %vm1079, %v2276, %v2102
  %v2310 = vsel %vm1079, %v2279, %v2104
  %v2312 = vsel %vm1079, %v2282, %v2106
  %v2314 = vsel %vm1079, %v2285, %v2108
  %v2315 = vsel %vm1213, %v2286, %v2045
  %v2317 = vsel %vm1213, %v2287, %v2047
  %v2319 = vsel %vm1213, %v2288, %v2049
  %v2321 = vsel %vm1213, %v2289, %v2051
  %v2323 = vsel %vm1213, %v2290, %v2053
  %v2325 = vsel %vm1213, %v2292, %v2055
  %v2327 = vsel %vm1213, %v2294, %v2057
  %v2329 = vsel %vm1213, %v2296, %v2059
  %v2331 = vsel %vm1213, %v2298, %v2061
  %v2334 = vsel %vm1213, %v2300, %v2111
  %v2337 = vsel %vm1213, %v2302, %v2113
  %v2340 = vsel %vm1213, %v2304, %v2115
  %v2343 = vsel %vm1213, %v2306, %v2117
  %v2346 = vsel %vm1213, %v2308, %v2119
  %v2349 = vsel %vm1213, %v2310, %v2121
  %v2352 = vsel %vm1213, %v2312, %v2123
  %v2355 = vsel %vm1213, %v2314, %v2125
  %v2357 = vld [vmem:[%s3] sm:$0xf]
  %v2358 = vld [vmem:[%s3 + $0x4] sm:$0xf]
  %v2359 = vld [vmem:[%s3 + $0x8] sm:$0xf]
  %v2360 = vld [vmem:[%s3 + $0xc] sm:$0xf]
  %v2361 = vld [vmem:[%s3 + $0x10] sm:$0xf]
  %v2362 = vld [vmem:[%s3 + $0x14] sm:$0xf]
  %v2363 = vld [vmem:[%s3 + $0x18] sm:$0xf]
  %v2364 = vld [vmem:[%s3 + $0x1c] sm:$0xf]
  %v2365 = vld [vmem:[%s3 + $0x20] sm:$0xf]
  %v2366 = vld [vmem:[%s3 + $0x24] sm:$0xf]
  %v2367 = vld [vmem:[%s3 + $0x28] sm:$0xf]
  %v2368 = vld [vmem:[%s3 + $0x2c] sm:$0xf]
  %v2369 = vld [vmem:[%s3 + $0x30] sm:$0xf]
  %v2370 = vld [vmem:[%s3 + $0x34] sm:$0xf]
  %v2371 = vld [vmem:[%s3 + $0x38] sm:$0xf]
  %v2372 = vld [vmem:[%s3 + $0x3c] sm:$0xf]
  %v2373 = vld [vmem:[%s3 + $0x40] sm:$0xf]
  %v2374 = vld [vmem:[%s3 + $0x44] sm:$0xf]
  %v2375 = vld [vmem:[%s3 + $0x48] sm:$0xf]
  %v2376 = vld [vmem:[%s3 + $0x4c] sm:$0xf]
  %v2377 = vld [vmem:[%s3 + $0x50] sm:$0xf]
  %v2378 = vld [vmem:[%s3 + $0x54] sm:$0xf]
  %v2379 = vld [vmem:[%s3 + $0x58] sm:$0xf]
  %v2380 = vld [vmem:[%s3 + $0x5c] sm:$0xf]
  %v2381 = vld [vmem:[%s3 + $0x60] sm:$0xf]
  %v2382 = vld [vmem:[%s3 + $0x64] sm:$0xf]
  %v2383 = vld [vmem:[%s3 + $0x68] sm:$0xf]
  %v2384 = vld [vmem:[%s3 + $0x6c] sm:$0xf]
  %v2385 = vld [vmem:[%s3 + $0x70] sm:$0xf]
  %v2386 = vld [vmem:[%s3 + $0x74] sm:$0xf]
  %v2387 = vld [vmem:[%s3 + $0x78] sm:$0xf]
  %v2388 = vld [vmem:[%s3 + $0x7c] sm:$0xf]
  %v2389 = vld [vmem:[%s3 + $0x80] sm:$0xf]
  %v2390 = vld [vmem:[%s3 + $0x84] sm:$0xf]
  %v2391 = vld [vmem:[%s3 + $0x88] sm:$0xf]
  %v2392 = vld [vmem:[%s3 + $0x8c] sm:$0xf]
  %v2394 = vlaneseq
  %v2395 = vshrl.u32 %v2394, 7
  %v2396 = vsub.s32 0, %v2395
  %v2397 = vrot.slane %v1936, %v2396
  %v2435 = vunpack.c.l.b16 %v2357
  %v2436 = vunpack.c.l.b16 %v2358
  %v2437 = vunpack.c.l.b16 %v2359
  %v2438 = vunpack.c.l.b16 %v2360
  %v2439 = vunpack.c.l.b16 %v2361
  %v2440 = vunpack.c.l.b16 %v2362
  %v2441 = vunpack.c.l.b16 %v2363
  %v2442 = vunpack.c.l.b16 %v2364
  %v2443 = vunpack.c.l.b16 %v2365
  %v2444 = vunpack.c.l.b16 %v2366
  %v2445 = vunpack.c.l.b16 %v2367
  %v2446 = vunpack.c.l.b16 %v2368
  %v2447 = vunpack.c.l.b16 %v2369
  %v2448 = vunpack.c.l.b16 %v2370
  %v2449 = vunpack.c.l.b16 %v2371
  %v2450 = vunpack.c.l.b16 %v2372
  %v2451 = vunpack.c.l.b16 %v2373
  %v2452 = vunpack.c.l.b16 %v2374
  %v2453 = vunpack.c.l.b16 %v2375
  %v2454 = vunpack.c.l.b16 %v2376
  %v2455 = vunpack.c.l.b16 %v2377
  %v2456 = vunpack.c.l.b16 %v2378
  %v2457 = vunpack.c.l.b16 %v2379
  %v2458 = vunpack.c.l.b16 %v2380
  %v2459 = vunpack.c.l.b16 %v2381
  %v2460 = vunpack.c.l.b16 %v2382
  %v2461 = vunpack.c.l.b16 %v2383
  %v2462 = vunpack.c.l.b16 %v2384
  %v2463 = vunpack.c.l.b16 %v2385
  %v2464 = vunpack.c.l.b16 %v2386
  %v2465 = vunpack.c.l.b16 %v2387
  %v2466 = vunpack.c.l.b16 %v2388
  %v2467 = vunpack.c.l.b16 %v2389
  %v2468 = vunpack.c.l.b16 %v2390
  %v2469 = vunpack.c.l.b16 %v2391
  %v2470 = vunpack.c.l.b16 %v2392
  %v2471 = vpack.c.b16 %v2436, %v2435
  %v2472 = vpack.c.b16 %v2438, %v2437
  %v2473 = vpack.c.b16 %v2440, %v2439
  %v2474 = vpack.c.b16 %v2442, %v2441
  %v2475 = vpack.c.b16 %v2444, %v2443
  %v2476 = vpack.c.b16 %v2446, %v2445
  %v2477 = vpack.c.b16 %v2448, %v2447
  %v2478 = vpack.c.b16 %v2450, %v2449
  %v2479 = vpack.c.b16 %v2452, %v2451
  %v2480 = vpack.c.b16 %v2454, %v2453
  %v2481 = vpack.c.b16 %v2456, %v2455
  %v2482 = vpack.c.b16 %v2458, %v2457
  %v2483 = vpack.c.b16 %v2460, %v2459
  %v2484 = vpack.c.b16 %v2462, %v2461
  %v2485 = vpack.c.b16 %v2464, %v2463
  %v2486 = vpack.c.b16 %v2466, %v2465
  %v2487 = vpack.c.b16 %v2468, %v2467
  %v2488 = vpack.c.b16 %v2470, %v2469
  %v2507 = vsel %vm945, %v1919, 0
  %v2509 = vsel %vm945, %v1920, 0
  %v2511 = vsel %vm945, %v1921, 0
  %v2513 = vsel %vm945, %v1922, 0
  %v2515 = vsel %vm945, %v1923, 0
  %v2517 = vsel %vm945, %v1924, 0
  %v2519 = vsel %vm945, %v1925, 0
  %v2521 = vsel %vm945, %v1926, 0
  %v2523 = vsel %vm945, %v1927, 0
  %v2526 = vsel %vm945, %v1928, 0
  %v2529 = vsel %vm945, %v1929, 0
  %v2532 = vsel %vm945, %v1930, 0
  %v2535 = vsel %vm945, %v1931, 0
  %v2538 = vsel %vm945, %v1932, 0
  %v2541 = vsel %vm945, %v1933, 0
  %v2544 = vsel %vm945, %v1934, 0
  %v2547 = vsel %vm945, %v1935, 0
  %2549 = vmatprep.subr.bf16.mxu0 0
  %2550 = vmatpush1.bf16.msra.mxu0 %v2478
  %2551 = vmatprep.subr.bf16.mxu0 0
  %2552 = vmatpush1.bf16.msra.mxu0 %v2477
  %2553 = vmatprep.subr.bf16.mxu0 0
  %2554 = vmatpush1.bf16.msra.mxu0 %v2476
  %2555 = vmatprep.subr.bf16.mxu0 0
  %2556 = vmatpush1.bf16.msra.mxu0 %v2475
  %2557 = vmatprep.subr.bf16.mxu0 0
  %2558 = vmatpush1.bf16.msra.mxu0 %v2474
  %2559 = vmatprep.subr.bf16.mxu0 0
  %2560 = vmatpush1.bf16.msra.mxu0 %v2473
  %2561 = vmatprep.subr.bf16.mxu0 0
  %2562 = vmatpush1.bf16.msra.mxu0 %v2472
  %2563 = vmatprep.subr.bf16.mxu0 0
  %2564 = vmatpush1.bf16.msra.mxu0 %v2471
  %2565 = vmatprep.subr.bf16.mxu0 0
  %2566 = vmatpush2.bf16.msra.mxu0 %v2486
  %2567 = vmatprep.subr.bf16.mxu0 0
  %2568 = vmatpush2.bf16.msra.mxu0 %v2485
  %2569 = vmatprep.subr.bf16.mxu0 0
  %2570 = vmatpush2.bf16.msra.mxu0 %v2484
  %2571 = vmatprep.subr.bf16.mxu0 0
  %2572 = vmatpush2.bf16.msra.mxu0 %v2483
  %2573 = vmatprep.subr.bf16.mxu0 0
  %2574 = vmatpush2.bf16.msra.mxu0 %v2482
  %2575 = vmatprep.subr.bf16.mxu0 0
  %2576 = vmatpush2.bf16.msra.mxu0 %v2481
  %2577 = vmatprep.subr.bf16.mxu0 0
  %2578 = vmatpush2.bf16.msra.mxu0 %v2480
  %2579 = vmatprep.subr.bf16.mxu0 0
  %2580 = vmatpush2.bf16.msra.mxu0 %v2479
  %2581 = vmatprep.mubr.bf16.mxu0 %v2315
  %2582 = vmatmul.mubr.bf16.gmra.mxu0 %v2212
  %v2583 = vpop.f32.mrf.mxu0
  %v2584 = vadd.f32 %v2397, %v2583
  %v2585 = vpop.f32.mrf.mxu0
  %v2586 = vpop.f32.mrf.mxu0
  %v2587 = vadd.f32 %v2397, %v2586
  %v2588 = vpop.f32.mrf.mxu0
  %2589 = vmatprep.mubr.bf16.mxu0 %v2317
  %2590 = vmatmul.mubr.bf16.gmra.mxu0 %v2215
  %v2591 = vpop.f32.mrf.mxu0
  %v2592 = vadd.f32 %v2397, %v2591
  %v2593 = vpop.f32.mrf.mxu0
  %v2594 = vpop.f32.mrf.mxu0
  %v2595 = vadd.f32 %v2397, %v2594
  %v2596 = vpop.f32.mrf.mxu0
  %2597 = vmatprep.mubr.bf16.mxu0 %v2319
  %2598 = vmatmul.mubr.bf16.gmra.mxu0 %v2218
  %v2599 = vpop.f32.mrf.mxu0
  %v2600 = vadd.f32 %v2397, %v2599
  %v2601 = vpop.f32.mrf.mxu0
  %v2602 = vpop.f32.mrf.mxu0
  %v2603 = vadd.f32 %v2397, %v2602
  %v2604 = vpop.f32.mrf.mxu0
  %2605 = vmatprep.mubr.bf16.mxu0 %v2321
  %2606 = vmatmul.mubr.bf16.gmra.mxu0 %v2221
  %v2607 = vpop.f32.mrf.mxu0
  %v2608 = vpop.f32.mrf.mxu0
  %v2609 = vpop.f32.mrf.mxu0
  %v2610 = vpop.f32.mrf.mxu0
  %2611 = vmatprep.mubr.bf16.mxu0 %v2323
  %2612 = vmatmul.mubr.bf16.gmra.mxu0 %v2224
  %v2613 = vpop.f32.mrf.mxu0
  %v2614 = vpop.f32.mrf.mxu0
  %v2615 = vpop.f32.mrf.mxu0
  %v2616 = vpop.f32.mrf.mxu0
  %2617 = vmatprep.mubr.bf16.mxu0 %v2325
  %2618 = vmatmul.mubr.bf16.gmra.mxu0 %v2227
  %v2619 = vpop.f32.mrf.mxu0
  %v2620 = vpop.f32.mrf.mxu0
  %v2621 = vpop.f32.mrf.mxu0
  %v2622 = vpop.f32.mrf.mxu0
  %2623 = vmatprep.mubr.bf16.mxu0 %v2327
  %2624 = vmatmul.mubr.bf16.gmra.mxu0 %v2230
  %v2625 = vpop.f32.mrf.mxu0
  %v2626 = vpop.f32.mrf.mxu0
  %v2627 = vpop.f32.mrf.mxu0
  %v2628 = vpop.f32.mrf.mxu0
  %2629 = vmatprep.mubr.bf16.mxu0 %v2329
  %2630 = vmatmul.mubr.bf16.gmra.mxu0 %v2233
  %v2631 = vpop.f32.mrf.mxu0
  %v2632 = vadd.f32 %v2397, %v2631
  %v2633 = vpop.f32.mrf.mxu0
  %v2634 = vpop.f32.mrf.mxu0
  %v2635 = vadd.f32 %v2397, %v2634
  %v2636 = vpop.f32.mrf.mxu0
  %2637 = vmatprep.mubr.bf16.mxu0 %v2331
  %2638 = vmatmul.mubr.bf16.gmra.mxu0 %v2236
  %v2639 = vpop.f32.mrf.mxu0
  %v2640 = vadd.f32 %v2397, %v2639
  %v2641 = vpop.f32.mrf.mxu0
  %v2642 = vpop.f32.mrf.mxu0
  %v2643 = vadd.f32 %v2397, %v2642
  %v2644 = vpop.f32.mrf.mxu0
  %2645 = vmatprep.mubr.bf16.mxu0 %v2334
  %2646 = vmatmul.mubr.bf16.gmra.mxu0 %v2239
  %v2647 = vpop.f32.mrf.mxu0
  %v2648 = vadd.f32 %v2397, %v2647
  %v2649 = vpop.f32.mrf.mxu0
  %v2650 = vpop.f32.mrf.mxu0
  %v2651 = vadd.f32 %v2397, %v2650
  %v2652 = vpop.f32.mrf.mxu0
  %2653 = vmatprep.mubr.bf16.mxu0 %v2337
  %2654 = vmatmul.mubr.bf16.gmra.mxu0 %v2242
  %v2655 = vpop.f32.mrf.mxu0
  %v2656 = vpop.f32.mrf.mxu0
  %v2657 = vpop.f32.mrf.mxu0
  %v2658 = vpop.f32.mrf.mxu0
  %2659 = vmatprep.mubr.bf16.mxu0 %v2340
  %2660 = vmatmul.mubr.bf16.gmra.mxu0 %v2245
  %v2661 = vpop.f32.mrf.mxu0
  %v2662 = vpop.f32.mrf.mxu0
  %v2663 = vpop.f32.mrf.mxu0
  %v2664 = vpop.f32.mrf.mxu0
  %2665 = vmatprep.mubr.bf16.mxu0 %v2343
  %2666 = vmatmul.mubr.bf16.gmra.mxu0 %v2248
  %v2667 = vpop.f32.mrf.mxu0
  %v2668 = vpop.f32.mrf.mxu0
  %v2669 = vpop.f32.mrf.mxu0
  %v2670 = vpop.f32.mrf.mxu0
  %2671 = vmatprep.mubr.bf16.mxu0 %v2346
  %2672 = vmatmul.mubr.bf16.gmra.mxu0 %v2251
  %v2673 = vpop.f32.mrf.mxu0
  %v2674 = vpop.f32.mrf.mxu0
  %v2675 = vpop.f32.mrf.mxu0
  %v2676 = vpop.f32.mrf.mxu0
  %2677 = vmatprep.mubr.bf16.mxu0 %v2349
  %2678 = vmatmul.mubr.bf16.gmra.mxu0 %v2254
  %v2679 = vpop.f32.mrf.mxu0
  %v2680 = vadd.f32 %v2397, %v2679
  %v2681 = vpop.f32.mrf.mxu0
  %v2682 = vpop.f32.mrf.mxu0
  %v2683 = vadd.f32 %v2397, %v2682
  %v2684 = vpop.f32.mrf.mxu0
  %2685 = vmatprep.mubr.bf16.mxu0 %v2352
  %2686 = vmatmul.mubr.bf16.gmra.mxu0 %v2257
  %v2687 = vpop.f32.mrf.mxu0
  %v2688 = vadd.f32 %v2397, %v2687
  %v2689 = vpop.f32.mrf.mxu0
  %v2690 = vpop.f32.mrf.mxu0
  %v2691 = vadd.f32 %v2397, %v2690
  %v2692 = vpop.f32.mrf.mxu0
  %2693 = vmatprep.mubr.bf16.mxu0 %v2355
  %2694 = vmatmul.mubr.bf16.gmra.mxu0 %v2260
  %v2695 = vpop.f32.mrf.mxu0
  %v2696 = vadd.f32 %v2397, %v2695
  %v2697 = vpop.f32.mrf.mxu0
  %v2698 = vpop.f32.mrf.mxu0
  %v2699 = vadd.f32 %v2397, %v2698
  %v2700 = vpop.f32.mrf.mxu0
  %2701 = vdwg.mxu0
  %2702 = vmatprep.subr.bf16.mxu0 0
  %2703 = vmatpush1.bf16.msra.mxu0 0
  %2704 = vmatprep.subr.bf16.mxu0 0
  %2705 = vmatpush1.bf16.msra.mxu0 0
  %2706 = vmatprep.subr.bf16.mxu0 0
  %2707 = vmatpush1.bf16.msra.mxu0 0
  %2708 = vmatprep.subr.bf16.mxu0 0
  %2709 = vmatpush1.bf16.msra.mxu0 0
  %2710 = vmatprep.subr.bf16.mxu0 0
  %2711 = vmatpush1.bf16.msra.mxu0 0
  %2712 = vmatprep.subr.bf16.mxu0 0
  %2713 = vmatpush1.bf16.msra.mxu0 0
  %2714 = vmatprep.subr.bf16.mxu0 0
  %2715 = vmatpush1.bf16.msra.mxu0 %v2488
  %2716 = vmatprep.subr.bf16.mxu0 0
  %2717 = vmatpush1.bf16.msra.mxu0 %v2487
  %2718 = vmatprep.subr.bf16.mxu0 0
  %2719 = vmatpush2.bf16.msra.mxu0 0
  %2720 = vmatprep.subr.bf16.mxu0 0
  %2721 = vmatpush2.bf16.msra.mxu0 0
  %2722 = vmatprep.subr.bf16.mxu0 0
  %2723 = vmatpush2.bf16.msra.mxu0 0
  %2724 = vmatprep.subr.bf16.mxu0 0
  %2725 = vmatpush2.bf16.msra.mxu0 0
  %2726 = vmatprep.subr.bf16.mxu0 0
  %2727 = vmatpush2.bf16.msra.mxu0 0
  %2728 = vmatprep.subr.bf16.mxu0 0
  %2729 = vmatpush2.bf16.msra.mxu0 0
  %2730 = vmatprep.subr.bf16.mxu0 0
  %2731 = vmatpush2.bf16.msra.mxu0 0
  %2732 = vmatprep.subr.bf16.mxu0 0
  %2733 = vmatpush2.bf16.msra.mxu0 0
  %2734 = vmatprep.mubr.bf16.mxu0 0
  %2735 = vmatmul.mubr.bf16.gmra.mxu0 %v2507
  %v2736 = vpop.f32.mrf.mxu0
  %v2737 = vadd.f32 %v2584, %v2736
  %v2738 = vpop.f32.mrf.mxu0
  %v2739 = vpop.f32.mrf.mxu0
  %v2740 = vadd.f32 %v2587, %v2739
  %v2741 = vpop.f32.mrf.mxu0
  %2742 = vmatprep.mubr.bf16.mxu0 0
  %2743 = vmatmul.mubr.bf16.gmra.mxu0 %v2509
  %v2744 = vpop.f32.mrf.mxu0
  %v2745 = vadd.f32 %v2592, %v2744
  %v2746 = vpop.f32.mrf.mxu0
  %v2747 = vpop.f32.mrf.mxu0
  %v2748 = vadd.f32 %v2595, %v2747
  %v2749 = vpop.f32.mrf.mxu0
  %2750 = vmatprep.mubr.bf16.mxu0 0
  %2751 = vmatmul.mubr.bf16.gmra.mxu0 %v2511
  %v2752 = vpop.f32.mrf.mxu0
  %v2753 = vadd.f32 %v2600, %v2752
  %v2754 = vpop.f32.mrf.mxu0
  %v2755 = vpop.f32.mrf.mxu0
  %v2756 = vadd.f32 %v2603, %v2755
  %v2757 = vpop.f32.mrf.mxu0
  %2758 = vmatprep.mubr.bf16.mxu0 0
  %2759 = vmatmul.mubr.bf16.gmra.mxu0 %v2513
  %v2760 = vpop.f32.mrf.mxu0
  %v2761 = vpop.f32.mrf.mxu0
  %v2762 = vpop.f32.mrf.mxu0
  %v2763 = vpop.f32.mrf.mxu0
  %2764 = vmatprep.mubr.bf16.mxu0 0
  %2765 = vmatmul.mubr.bf16.gmra.mxu0 %v2515
  %v2766 = vpop.f32.mrf.mxu0
  %v2767 = vpop.f32.mrf.mxu0
  %v2768 = vpop.f32.mrf.mxu0
  %v2769 = vpop.f32.mrf.mxu0
  %2770 = vmatprep.mubr.bf16.mxu0 0
  %2771 = vmatmul.mubr.bf16.gmra.mxu0 %v2517
  %v2772 = vpop.f32.mrf.mxu0
  %v2773 = vpop.f32.mrf.mxu0
  %v2774 = vpop.f32.mrf.mxu0
  %v2775 = vpop.f32.mrf.mxu0
  %2776 = vmatprep.mubr.bf16.mxu0 0
  %2777 = vmatmul.mubr.bf16.gmra.mxu0 %v2519
  %v2778 = vpop.f32.mrf.mxu0
  %v2779 = vpop.f32.mrf.mxu0
  %v2780 = vpop.f32.mrf.mxu0
  %v2781 = vpop.f32.mrf.mxu0
  %2782 = vmatprep.mubr.bf16.mxu0 0
  %2783 = vmatmul.mubr.bf16.gmra.mxu0 %v2521
  %v2784 = vpop.f32.mrf.mxu0
  %v2785 = vadd.f32 %v2632, %v2784
  %v2786 = vpop.f32.mrf.mxu0
  %v2787 = vpop.f32.mrf.mxu0
  %v2788 = vadd.f32 %v2635, %v2787
  %v2789 = vpop.f32.mrf.mxu0
  %2790 = vmatprep.mubr.bf16.mxu0 0
  %2791 = vmatmul.mubr.bf16.gmra.mxu0 %v2523
  %v2792 = vpop.f32.mrf.mxu0
  %v2793 = vadd.f32 %v2640, %v2792
  %v2794 = vpop.f32.mrf.mxu0
  %v2795 = vpop.f32.mrf.mxu0
  %v2796 = vadd.f32 %v2643, %v2795
  %v2797 = vpop.f32.mrf.mxu0
  %2798 = vmatprep.mubr.bf16.mxu0 0
  %2799 = vmatmul.mubr.bf16.gmra.mxu0 %v2526
  %v2800 = vpop.f32.mrf.mxu0
  %v2801 = vadd.f32 %v2648, %v2800
  %v2802 = vpop.f32.mrf.mxu0
  %v2803 = vpop.f32.mrf.mxu0
  %v2804 = vadd.f32 %v2651, %v2803
  %v2805 = vpop.f32.mrf.mxu0
  %2806 = vmatprep.mubr.bf16.mxu0 0
  %2807 = vmatmul.mubr.bf16.gmra.mxu0 %v2529
  %v2808 = vpop.f32.mrf.mxu0
  %v2809 = vpop.f32.mrf.mxu0
  %v2810 = vpop.f32.mrf.mxu0
  %v2811 = vpop.f32.mrf.mxu0
  %2812 = vmatprep.mubr.bf16.mxu0 0
  %2813 = vmatmul.mubr.bf16.gmra.mxu0 %v2532
  %v2814 = vpop.f32.mrf.mxu0
  %v2815 = vpop.f32.mrf.mxu0
  %v2816 = vpop.f32.mrf.mxu0
  %v2817 = vpop.f32.mrf.mxu0
  %2818 = vmatprep.mubr.bf16.mxu0 0
  %2819 = vmatmul.mubr.bf16.gmra.mxu0 %v2535
  %v2820 = vpop.f32.mrf.mxu0
  %v2821 = vpop.f32.mrf.mxu0
  %v2822 = vpop.f32.mrf.mxu0
  %v2823 = vpop.f32.mrf.mxu0
  %2824 = vmatprep.mubr.bf16.mxu0 0
  %2825 = vmatmul.mubr.bf16.gmra.mxu0 %v2538
  %v2826 = vpop.f32.mrf.mxu0
  %v2827 = vpop.f32.mrf.mxu0
  %v2828 = vpop.f32.mrf.mxu0
  %v2829 = vpop.f32.mrf.mxu0
  %2830 = vmatprep.mubr.bf16.mxu0 0
  %2831 = vmatmul.mubr.bf16.gmra.mxu0 %v2541
  %v2832 = vpop.f32.mrf.mxu0
  %v2833 = vadd.f32 %v2680, %v2832
  %v2834 = vpop.f32.mrf.mxu0
  %v2835 = vpop.f32.mrf.mxu0
  %v2836 = vadd.f32 %v2683, %v2835
  %v2837 = vpop.f32.mrf.mxu0
  %2838 = vmatprep.mubr.bf16.mxu0 0
  %2839 = vmatmul.mubr.bf16.gmra.mxu0 %v2544
  %v2840 = vpop.f32.mrf.mxu0
  %v2841 = vadd.f32 %v2688, %v2840
  %v2842 = vpop.f32.mrf.mxu0
  %v2843 = vpop.f32.mrf.mxu0
  %v2844 = vadd.f32 %v2691, %v2843
  %v2845 = vpop.f32.mrf.mxu0
  %2846 = vmatprep.mubr.bf16.mxu0 0
  %2847 = vmatmul.mubr.bf16.gmra.mxu0 %v2547
  %v2848 = vpop.f32.mrf.mxu0
  %v2849 = vadd.f32 %v2696, %v2848
  %v2850 = vpop.f32.mrf.mxu0
  %v2851 = vpop.f32.mrf.mxu0
  %v2852 = vadd.f32 %v2699, %v2851
  %v2853 = vpop.f32.mrf.mxu0
  %2854 = vdwg.mxu0
  %v2855 = vmax.f32 %v2737, 0.0
  %v2856 = vmax.f32 %v2740, 0.0
  %v2857 = vmax.f32 %v2745, 0.0
  %v2858 = vmax.f32 %v2748, 0.0
  %v2859 = vmax.f32 %v2753, 0.0
  %v2860 = vmax.f32 %v2756, 0.0
  %v2861 = vmax.f32 %v2785, 0.0
  %v2862 = vmax.f32 %v2788, 0.0
  %v2863 = vmax.f32 %v2793, 0.0
  %v2864 = vmax.f32 %v2796, 0.0
  %v2865 = vmax.f32 %v2801, 0.0
  %v2866 = vmax.f32 %v2804, 0.0
  %v2867 = vmax.f32 %v2833, 0.0
  %v2868 = vmax.f32 %v2836, 0.0
  %v2869 = vmax.f32 %v2841, 0.0
  %v2870 = vmax.f32 %v2844, 0.0
  %v2871 = vmax.f32 %v2849, 0.0
  %v2872 = vmax.f32 %v2852, 0.0
  %v2873 = vpack.c.bf16 %v2856, %v2855
  %v2874 = vpack.c.bf16 %v2858, %v2857
  %v2875 = vpack.c.bf16 %v2860, %v2859
  %v2876 = vpack.c.bf16 %v2862, %v2861
  %v2877 = vpack.c.bf16 %v2864, %v2863
  %v2878 = vpack.c.bf16 %v2866, %v2865
  %v2879 = vpack.c.bf16 %v2868, %v2867
  %v2880 = vpack.c.bf16 %v2870, %v2869
  %v2881 = vpack.c.bf16 %v2872, %v2871
  %v2882 = vld [vmem:[%s6] sm:$0x1]
  %2884 = vrot.lane.b32.xlu0 %v2874, 32
  %v2885 = vpop.permute.xlu0 %2884
  %2887 = vrot.lane.b32.xlu0 %v2875, 64
  %v2888 = vpop.permute.xlu0 %2887
  %2890 = vrot.lane.b32.xlu0 %v2876, 96
  %v2891 = vpop.permute.xlu0 %2890
  %2893 = vrot.lane.b32.xlu0 %v2878, 32
  %v2894 = vpop.permute.xlu0 %2893
  %2896 = vrot.lane.b32.xlu0 %v2879, 64
  %v2897 = vpop.permute.xlu0 %2896
  %2899 = vrot.lane.b32.xlu0 %v2880, 96
  %v2900 = vpop.permute.xlu0 %2899
  %v2903 = vsel %vm945, %v2873, %v2885
  %v2905 = vsel %vm1079, %v2903, %v2888
  %v2907 = vsel %vm1213, %v2905, %v2891
  %v2911 = vsel %vm945, %v2877, %v2894
  %v2913 = vsel %vm1079, %v2911, %v2897
  %v2915 = vsel %vm1213, %v2913, %v2900
  %v2917 = vld [vmem:[%s5] sm:$0xf]
  %v2918 = vld [vmem:[%s5 + $0x4] sm:$0xf]
  %v2919 = vld [vmem:[%s5 + $0x8] sm:$0xf]
  %v2920 = vld [vmem:[%s5 + $0xc] sm:$0xf]
  %v2921 = vld [vmem:[%s5 + $0x10] sm:$0xf]
  %v2922 = vld [vmem:[%s5 + $0x14] sm:$0xf]
  %v2923 = vld [vmem:[%s5 + $0x18] sm:$0xf]
  %v2924 = vld [vmem:[%s5 + $0x1c] sm:$0xf]
  %v2925 = vld [vmem:[%s5 + $0x20] sm:$0xf]
  %v2926 = vld [vmem:[%s5 + $0x24] sm:$0xf]
  %v2927 = vld [vmem:[%s5 + $0x28] sm:$0xf]
  %v2928 = vld [vmem:[%s5 + $0x2c] sm:$0xf]
  %v2929 = vld [vmem:[%s5 + $0x30] sm:$0xf]
  %v2930 = vld [vmem:[%s5 + $0x34] sm:$0xf]
  %v2931 = vld [vmem:[%s5 + $0x38] sm:$0xf]
  %v2932 = vld [vmem:[%s5 + $0x3c] sm:$0xf]
  %v2933 = vld [vmem:[%s5 + $0x40] sm:$0xf]
  %v2934 = vld [vmem:[%s5 + $0x44] sm:$0xf]
  %v2935 = vld [vmem:[%s5 + $0x48] sm:$0xf]
  %v2936 = vld [vmem:[%s5 + $0x4c] sm:$0xf]
  %v2937 = vld [vmem:[%s5 + $0x50] sm:$0xf]
  %v2938 = vld [vmem:[%s5 + $0x54] sm:$0xf]
  %v2939 = vld [vmem:[%s5 + $0x58] sm:$0xf]
  %v2940 = vld [vmem:[%s5 + $0x5c] sm:$0xf]
  %v2941 = vld [vmem:[%s5 + $0x60] sm:$0xf]
  %v2942 = vld [vmem:[%s5 + $0x64] sm:$0xf]
  %v2943 = vld [vmem:[%s5 + $0x68] sm:$0xf]
  %v2944 = vld [vmem:[%s5 + $0x6c] sm:$0xf]
  %v2945 = vld [vmem:[%s5 + $0x70] sm:$0xf]
  %v2946 = vld [vmem:[%s5 + $0x74] sm:$0xf]
  %v2947 = vld [vmem:[%s5 + $0x78] sm:$0xf]
  %v2948 = vld [vmem:[%s5 + $0x7c] sm:$0xf]
  %v2949 = vld [vmem:[%s5 + $0x80] sm:$0xf]
  %v2950 = vld [vmem:[%s5 + $0x84] sm:$0xf]
  %v2951 = vld [vmem:[%s5 + $0x88] sm:$0xf]
  %v2952 = vld [vmem:[%s5 + $0x8c] sm:$0xf]
  %v2954 = vlaneseq
  %v2955 = vshrl.u32 %v2954, 7
  %v2956 = vsub.s32 0, %v2955
  %v2957 = vrot.slane %v2882, %v2956
  %v2995 = vunpack.c.l.b16 %v2917
  %v2996 = vunpack.c.l.b16 %v2918
  %v2997 = vunpack.c.l.b16 %v2919
  %v2998 = vunpack.c.l.b16 %v2920
  %v2999 = vunpack.c.l.b16 %v2921
  %v3000 = vunpack.c.l.b16 %v2922
  %v3001 = vunpack.c.l.b16 %v2923
  %v3002 = vunpack.c.l.b16 %v2924
  %v3003 = vunpack.c.l.b16 %v2925
  %v3004 = vunpack.c.l.b16 %v2926
  %v3005 = vunpack.c.l.b16 %v2927
  %v3006 = vunpack.c.l.b16 %v2928
  %v3007 = vunpack.c.l.b16 %v2929
  %v3008 = vunpack.c.l.b16 %v2930
  %v3009 = vunpack.c.l.b16 %v2931
  %v3010 = vunpack.c.l.b16 %v2932
  %v3011 = vunpack.c.l.b16 %v2933
  %v3012 = vunpack.c.l.b16 %v2934
  %v3013 = vunpack.c.l.b16 %v2935
  %v3014 = vunpack.c.l.b16 %v2936
  %v3015 = vunpack.c.l.b16 %v2937
  %v3016 = vunpack.c.l.b16 %v2938
  %v3017 = vunpack.c.l.b16 %v2939
  %v3018 = vunpack.c.l.b16 %v2940
  %v3019 = vunpack.c.l.b16 %v2941
  %v3020 = vunpack.c.l.b16 %v2942
  %v3021 = vunpack.c.l.b16 %v2943
  %v3022 = vunpack.c.l.b16 %v2944
  %v3023 = vunpack.c.l.b16 %v2945
  %v3024 = vunpack.c.l.b16 %v2946
  %v3025 = vunpack.c.l.b16 %v2947
  %v3026 = vunpack.c.l.b16 %v2948
  %v3027 = vunpack.c.l.b16 %v2949
  %v3028 = vunpack.c.l.b16 %v2950
  %v3029 = vunpack.c.l.b16 %v2951
  %v3030 = vunpack.c.l.b16 %v2952
  %v3031 = vpack.c.b16 %v2996, %v2995
  %v3032 = vpack.c.b16 %v2998, %v2997
  %v3033 = vpack.c.b16 %v3000, %v2999
  %v3034 = vpack.c.b16 %v3002, %v3001
  %v3035 = vpack.c.b16 %v3004, %v3003
  %v3036 = vpack.c.b16 %v3006, %v3005
  %v3037 = vpack.c.b16 %v3008, %v3007
  %v3038 = vpack.c.b16 %v3010, %v3009
  %v3039 = vpack.c.b16 %v3012, %v3011
  %v3040 = vpack.c.b16 %v3014, %v3013
  %v3041 = vpack.c.b16 %v3016, %v3015
  %v3042 = vpack.c.b16 %v3018, %v3017
  %v3043 = vpack.c.b16 %v3020, %v3019
  %v3044 = vpack.c.b16 %v3022, %v3021
  %v3045 = vpack.c.b16 %v3024, %v3023
  %v3046 = vpack.c.b16 %v3026, %v3025
  %v3047 = vpack.c.b16 %v3028, %v3027
  %v3048 = vpack.c.b16 %v3030, %v3029
  %v3068 = vsel %vm945, %v2881, 0
  %3070 = vmatprep.subr.bf16.mxu0 0
  %3071 = vmatpush1.bf16.msra.mxu0 %v3038
  %3072 = vmatprep.subr.bf16.mxu0 0
  %3073 = vmatpush1.bf16.msra.mxu0 %v3037
  %3074 = vmatprep.subr.bf16.mxu0 0
  %3075 = vmatpush1.bf16.msra.mxu0 %v3036
  %3076 = vmatprep.subr.bf16.mxu0 0
  %3077 = vmatpush1.bf16.msra.mxu0 %v3035
  %3078 = vmatprep.subr.bf16.mxu0 0
  %3079 = vmatpush1.bf16.msra.mxu0 %v3034
  %3080 = vmatprep.subr.bf16.mxu0 0
  %3081 = vmatpush1.bf16.msra.mxu0 %v3033
  %3082 = vmatprep.subr.bf16.mxu0 0
  %3083 = vmatpush1.bf16.msra.mxu0 %v3032
  %3084 = vmatprep.subr.bf16.mxu0 0
  %3085 = vmatpush1.bf16.msra.mxu0 %v3031
  %3086 = vmatprep.subr.bf16.mxu0 0
  %3087 = vmatpush2.bf16.msra.mxu0 %v3046
  %3088 = vmatprep.subr.bf16.mxu0 0
  %3089 = vmatpush2.bf16.msra.mxu0 %v3045
  %3090 = vmatprep.subr.bf16.mxu0 0
  %3091 = vmatpush2.bf16.msra.mxu0 %v3044
  %3092 = vmatprep.subr.bf16.mxu0 0
  %3093 = vmatpush2.bf16.msra.mxu0 %v3043
  %3094 = vmatprep.subr.bf16.mxu0 0
  %3095 = vmatpush2.bf16.msra.mxu0 %v3042
  %3096 = vmatprep.subr.bf16.mxu0 0
  %3097 = vmatpush2.bf16.msra.mxu0 %v3041
  %3098 = vmatprep.subr.bf16.mxu0 0
  %3099 = vmatpush2.bf16.msra.mxu0 %v3040
  %3100 = vmatprep.subr.bf16.mxu0 0
  %3101 = vmatpush2.bf16.msra.mxu0 %v3039
  %3102 = vmatprep.mubr.bf16.mxu0 %v2915
  %3103 = vmatmul.mubr.bf16.gmra.mxu0 %v2907
  %v3104 = vpop.f32.mrf.mxu0
  %v3105 = vadd.f32 %v2957, %v3104
  %v3106 = vpop.f32.mrf.mxu0
  %v3107 = vpop.f32.mrf.mxu0
  %v3108 = vadd.f32 %v2957, %v3107
  %v3109 = vpop.f32.mrf.mxu0
  %3110 = vdwg.mxu0
  %3111 = vmatprep.subr.bf16.mxu0 0
  %3112 = vmatpush1.bf16.msra.mxu0 0
  %3113 = vmatprep.subr.bf16.mxu0 0
  %3114 = vmatpush1.bf16.msra.mxu0 0
  %3115 = vmatprep.subr.bf16.mxu0 0
  %3116 = vmatpush1.bf16.msra.mxu0 0
  %3117 = vmatprep.subr.bf16.mxu0 0
  %3118 = vmatpush1.bf16.msra.mxu0 0
  %3119 = vmatprep.subr.bf16.mxu0 0
  %3120 = vmatpush1.bf16.msra.mxu0 0
  %3121 = vmatprep.subr.bf16.mxu0 0
  %3122 = vmatpush1.bf16.msra.mxu0 0
  %3123 = vmatprep.subr.bf16.mxu0 0
  %3124 = vmatpush1.bf16.msra.mxu0 %v3048
  %3125 = vmatprep.subr.bf16.mxu0 0
  %3126 = vmatpush1.bf16.msra.mxu0 %v3047
  %3127 = vmatprep.subr.bf16.mxu0 0
  %3128 = vmatpush2.bf16.msra.mxu0 0
  %3129 = vmatprep.subr.bf16.mxu0 0
  %3130 = vmatpush2.bf16.msra.mxu0 0
  %3131 = vmatprep.subr.bf16.mxu0 0
  %3132 = vmatpush2.bf16.msra.mxu0 0
  %3133 = vmatprep.subr.bf16.mxu0 0
  %3134 = vmatpush2.bf16.msra.mxu0 0
  %3135 = vmatprep.subr.bf16.mxu0 0
  %3136 = vmatpush2.bf16.msra.mxu0 0
  %3137 = vmatprep.subr.bf16.mxu0 0
  %3138 = vmatpush2.bf16.msra.mxu0 0
  %3139 = vmatprep.subr.bf16.mxu0 0
  %3140 = vmatpush2.bf16.msra.mxu0 0
  %3141 = vmatprep.subr.bf16.mxu0 0
  %3142 = vmatpush2.bf16.msra.mxu0 0
  %3143 = vmatprep.mubr.bf16.mxu0 0
  %3144 = vmatmul.mubr.bf16.gmra.mxu0 %v3068
  %v3145 = vpop.f32.mrf.mxu0
  %v3146 = vadd.f32 %v3105, %v3145
  %v3147 = vpop.f32.mrf.mxu0
  %v3148 = vpop.f32.mrf.mxu0
  %v3149 = vadd.f32 %v3108, %v3148
  %v3150 = vpop.f32.mrf.mxu0
  %3151 = vdwg.mxu0
  %v3152 = vmax.f32 %v3146, 0.0
  %v3153 = vmax.f32 %v3149, 0.0
  %v3154 = vpack.c.bf16 %v3153, %v3152
  %v3155 = vld [vmem:[%s7] sm:$0xf]
  %v3156 = vld [vmem:[%s7 + $0x4] sm:$0xf]
  %v3157 = vld [vmem:[%s7 + $0x8] sm:$0xf]
  %v3158 = vld [vmem:[%s7 + $0xc] sm:$0xf]
  %v3159 = vld [vmem:[%s7 + $0x10] sm:$0xf]
  %v3160 = vld [vmem:[%s7 + $0x14] sm:$0xf]
  %v3161 = vld [vmem:[%s7 + $0x18] sm:$0xf]
  %v3162 = vld [vmem:[%s7 + $0x1c] sm:$0xf]
  %v3163 = vld [vmem:[%s8] sm:$0x1]
  %v3165 = vlaneseq
  %v3166 = vshrl.u32 %v3165, 7
  %v3167 = vsub.s32 0, %v3166
  %v3168 = vrot.slane %v3163, %v3167
  %v3178 = vunpack.c.l.b16 %v3155
  %v3179 = vunpack.c.l.b16 %v3156
  %v3180 = vunpack.c.l.b16 %v3157
  %v3181 = vunpack.c.l.b16 %v3158
  %v3182 = vunpack.c.l.b16 %v3159
  %v3183 = vunpack.c.l.b16 %v3160
  %v3184 = vunpack.c.l.b16 %v3161
  %v3185 = vunpack.c.l.b16 %v3162
  %v3186 = vpack.c.b16 %v3179, %v3178
  %v3187 = vpack.c.b16 %v3181, %v3180
  %v3188 = vpack.c.b16 %v3183, %v3182
  %v3189 = vpack.c.b16 %v3185, %v3184
  %v3195 = vsel %vm1079, %v3154, 0
  %3197 = vmatprep.subr.bf16.mxu0 0
  %3198 = vmatpush1.bf16.msra.mxu0 0
  %3199 = vmatprep.subr.bf16.mxu0 0
  %3200 = vmatpush1.bf16.msra.mxu0 0
  %3201 = vmatprep.subr.bf16.mxu0 0
  %3202 = vmatpush1.bf16.msra.mxu0 0
  %3203 = vmatprep.subr.bf16.mxu0 0
  %3204 = vmatpush1.bf16.msra.mxu0 0
  %3205 = vmatprep.subr.bf16.mxu0 0
  %3206 = vmatpush1.bf16.msra.mxu0 %v3189
  %3207 = vmatprep.subr.bf16.mxu0 0
  %3208 = vmatpush1.bf16.msra.mxu0 %v3188
  %3209 = vmatprep.subr.bf16.mxu0 0
  %3210 = vmatpush1.bf16.msra.mxu0 %v3187
  %3211 = vmatprep.subr.bf16.mxu0 0
  %3212 = vmatpush1.bf16.msra.mxu0 %v3186
  %3213 = vmatprep.subr.bf16.mxu0 0
  %3214 = vmatpush2.bf16.msra.mxu0 0
  %3215 = vmatprep.subr.bf16.mxu0 0
  %3216 = vmatpush2.bf16.msra.mxu0 0
  %3217 = vmatprep.subr.bf16.mxu0 0
  %3218 = vmatpush2.bf16.msra.mxu0 0
  %3219 = vmatprep.subr.bf16.mxu0 0
  %3220 = vmatpush2.bf16.msra.mxu0 0
  %3221 = vmatprep.subr.bf16.mxu0 0
  %3222 = vmatpush2.bf16.msra.mxu0 0
  %3223 = vmatprep.subr.bf16.mxu0 0
  %3224 = vmatpush2.bf16.msra.mxu0 0
  %3225 = vmatprep.subr.bf16.mxu0 0
  %3226 = vmatpush2.bf16.msra.mxu0 0
  %3227 = vmatprep.subr.bf16.mxu0 0
  %3228 = vmatpush2.bf16.msra.mxu0 0
  %3229 = vmatprep.mubr.bf16.mxu0 0
  %3230 = vmatmul.mubr.bf16.gmra.mxu0 %v3195
  %v3231 = vpop.f32.mrf.mxu0
  %v3232 = vadd.f32 %v3168, %v3231
  %v3233 = vpop.f32.mrf.mxu0
  %v3234 = vpop.f32.mrf.mxu0
  %v3235 = vadd.f32 %v3168, %v3234
  %v3236 = vpop.f32.mrf.mxu0
  %3237 = vdwg.mxu0
  %v3238 = vmax.f32 %v3232, 0.0
  %v3239 = vmax.f32 %v3235, 0.0
  %v3240 = vpack.c.bf16 %v3239, %v3238
  %v3241 = vld [vmem:[%s9] sm:$0xf]
  %v3242 = vld [vmem:[%s9 + $0x4] sm:$0xf]
  %v3243 = vld [vmem:[%s9 + $0x8] sm:$0xf]
  %v3244 = vld [vmem:[%s9 + $0xc] sm:$0xf]
  %v3245 = vld [vmem:[%s9 + $0x10] sm:$0xf]
  %v3246 = vld [vmem:[%s9 + $0x14] sm:$0xf]
  %v3247 = vld [vmem:[%s9 + $0x18] sm:$0xf]
  %v3248 = vld [vmem:[%s9 + $0x1c] sm:$0xf]
  %v3249 = vld [vmem:[%s10] sm:$0x1]
  %v3251 = vlaneseq
  %v3252 = vshrl.u32 %v3251, 7
  %v3253 = vsub.s32 0, %v3252
  %v3254 = vrot.slane %v3249, %v3253
  %v3264 = vunpack.c.l.b16 %v3241
  %v3265 = vunpack.c.l.b16 %v3242
  %v3266 = vunpack.c.l.b16 %v3243
  %v3267 = vunpack.c.l.b16 %v3244
  %v3268 = vunpack.c.l.b16 %v3245
  %v3269 = vunpack.c.l.b16 %v3246
  %v3270 = vunpack.c.l.b16 %v3247
  %v3271 = vunpack.c.l.b16 %v3248
  %v3272 = vpack.c.b16 %v3265, %v3264
  %v3273 = vpack.c.b16 %v3267, %v3266
  %v3274 = vpack.c.b16 %v3269, %v3268
  %v3275 = vpack.c.b16 %v3271, %v3270
  %v3281 = vsel %vm1079, %v3240, 0
  %3283 = vmatprep.subr.bf16.mxu0 0
  %3284 = vmatpush1.bf16.msra.mxu0 0
  %3285 = vmatprep.subr.bf16.mxu0 0
  %3286 = vmatpush1.bf16.msra.mxu0 0
  %3287 = vmatprep.subr.bf16.mxu0 0
  %3288 = vmatpush1.bf16.msra.mxu0 0
  %3289 = vmatprep.subr.bf16.mxu0 0
  %3290 = vmatpush1.bf16.msra.mxu0 0
  %3291 = vmatprep.subr.bf16.mxu0 0
  %3292 = vmatpush1.bf16.msra.mxu0 %v3275
  %3293 = vmatprep.subr.bf16.mxu0 0
  %3294 = vmatpush1.bf16.msra.mxu0 %v3274
  %3295 = vmatprep.subr.bf16.mxu0 0
  %3296 = vmatpush1.bf16.msra.mxu0 %v3273
  %3297 = vmatprep.subr.bf16.mxu0 0
  %3298 = vmatpush1.bf16.msra.mxu0 %v3272
  %3299 = vmatprep.subr.bf16.mxu0 0
  %3300 = vmatpush2.bf16.msra.mxu0 0
  %3301 = vmatprep.subr.bf16.mxu0 0
  %3302 = vmatpush2.bf16.msra.mxu0 0
  %3303 = vmatprep.subr.bf16.mxu0 0
  %3304 = vmatpush2.bf16.msra.mxu0 0
  %3305 = vmatprep.subr.bf16.mxu0 0
  %3306 = vmatpush2.bf16.msra.mxu0 0
  %3307 = vmatprep.subr.bf16.mxu0 0
  %3308 = vmatpush2.bf16.msra.mxu0 0
  %3309 = vmatprep.subr.bf16.mxu0 0
  %3310 = vmatpush2.bf16.msra.mxu0 0
  %3311 = vmatprep.subr.bf16.mxu0 0
  %3312 = vmatpush2.bf16.msra.mxu0 0
  %3313 = vmatprep.subr.bf16.mxu0 0
  %3314 = vmatpush2.bf16.msra.mxu0 0
  %3315 = vmatprep.mubr.bf16.mxu0 0
  %3316 = vmatmul.mubr.bf16.gmra.mxu0 %v3281
  %v3317 = vpop.f32.mrf.mxu0
  %v3318 = vadd.f32 %v3254, %v3317
  %v3319 = vpop.f32.mrf.mxu0
  %v3320 = vpop.f32.mrf.mxu0
  %v3321 = vadd.f32 %v3254, %v3320
  %v3322 = vpop.f32.mrf.mxu0
  %3323 = vdwg.mxu0
  %v3324 = vsub.f32 0.0, %v3318
  %v3325 = vsub.f32 0.0, %v3321
  %v3326 = vmul.f32 %v3324, 1.442695
  %v3327 = vpow.pop %v3326
  %v3328 = vmul.f32 %v3325, 1.442695
  %v3329 = vpow.pop %v3328
  %v3330 = vadd.f32 %v3327, 1.0
  %v3331 = vadd.f32 %v3329, 1.0
  %v3332 = vrcp.pop %v3330
  %v3333 = vrcp.pop %v3331
  %v3334 = vlaneseq
  %v3335 = vand.u32 %v3334, 127
  %vm3336 = vcmp.eq.s32.totalorder %v3335, 32
  %v3337 = vsel %vm3336, %v3332, %v3318
  %v3338 = vsel %vm3336, %v3333, %v3321
  %3339 = vst [vmem:[%s11] sm:$0xff] %v3337
  %3340 = vst [vmem:[%s11 + $0x8] sm:$0xff] %v3338
  // Predicated region
  $region46: #{visest_forward.1} parent=0 // pred_check
    _
  $region47: #{visest_forward.1} parent=0 // pred_check_branch
    %3342 = sbr.rel (0) target = $region49
  $region48: #{visest_forward.1} parent=0 // pred_region
    _
  $region49: #{visest_forward.1} parent=0 // pred_fallthru
    _
  // Predicated region
  $region50: #{visest_forward.1} parent=0 // pred_check
    _
  $region51: #{visest_forward.1} parent=0 // pred_check_branch
    %3344 = sbr.rel (0) target = $region53
  $region52: #{visest_forward.1} parent=0 // pred_region
    _
  $region53: #{visest_forward.1} parent=0 // pred_fallthru
    _

</llo_original>
